<compile_context>
chip_gen: v7x
topology: tpu7x:2x2x1
jax: 0.10.0
libtpu: 0.0.40
codegen_flags: <defaults>
</compile_context>

<pallas_src>
import functools

import numpy as np

import jax
import jax.numpy as jnp
from jax.experimental import pallas as pl
from jax.experimental.pallas import tpu as pltpu

LN_EPS = 1e-5                      # PyTorch nn.LayerNorm default
_INV_SQRT2 = 0.7071067811865476

# Row indices inside the packed (16, D) vector-parameter operand.
_V_LN1_WA, _V_LN1_BA, _V_LN1_WB, _V_LN1_BB = 0, 1, 2, 3
_V_FC11_B, _V_FC12_B = 4, 5
_V_LN2_W, _V_LN2_B = 6, 7
_V_FC21_B, _V_FC22_B = 8, 9
_V_LNF_W, _V_LNF_B = 10, 11
_NUM_VEC_ROWS = 16                 # 12 used, padded to a sublane multiple


# ----------------------------- Pallas kernel ------------------------------ #
def _fuse_kernel(text_ref, obj_ref, vecs_ref,
                 fc11_wa_ref, fc11_wb_ref, fc12_w_ref, fc21_w_ref, fc22_w_ref,
                 out_ref, *, approximate_gelu):
    x = text_ref[...].astype(jnp.float32)     # (tm, D) image-token text rows
    o = obj_ref[...].astype(jnp.float32)      # (tm, D) paired object tokens
    D = x.shape[-1]

    def vec(row):                              # (1, D) f32 parameter vector
        return vecs_ref[row:row + 1, :]

    if approximate_gelu:
        def gelu(v):                           # tanh form -> EUP (frees VALU)
            return jax.nn.gelu(v, approximate=True)
    else:
        def gelu(v):                           # torch nn.GELU() (erf) parity
            return 0.5 * v * (1.0 + jax.lax.erf(v * _INV_SQRT2))

    def layernorm(v, w, b):
        mu = jnp.mean(v, axis=-1, keepdims=True)
        var = jnp.mean(jnp.square(v - mu), axis=-1, keepdims=True)
        return (v - mu) * jax.lax.rsqrt(var + LN_EPS) * w + b

    def mdot(a_f32, w_ref):                    # bf16 MXU operands, f32 accumulate
        return jnp.dot(a_f32.astype(w_ref.dtype), w_ref[...],
                       preferred_element_type=jnp.float32)

    # ---- mlp1 over the virtual concat [x, o] (never materialized) ----
    inv_2d = 1.0 / (2.0 * D)
    mu = (jnp.sum(x, axis=-1, keepdims=True)
          + jnp.sum(o, axis=-1, keepdims=True)) * inv_2d
    xc = x - mu
    oc = o - mu
    var = (jnp.sum(xc * xc, axis=-1, keepdims=True)
           + jnp.sum(oc * oc, axis=-1, keepdims=True)) * inv_2d
    inv_std = jax.lax.rsqrt(var + LN_EPS)
    xn = (xc * inv_std) * vec(_V_LN1_WA) + vec(_V_LN1_BA)
    on = (oc * inv_std) * vec(_V_LN1_WB) + vec(_V_LN1_BB)

    # cat([x, o]) @ W  ==  x @ W[:D] + o @ W[D:]
    h = mdot(xn, fc11_wa_ref) + mdot(on, fc11_wb_ref) + vec(_V_FC11_B)
    h = gelu(h)
    h = mdot(h, fc12_w_ref) + vec(_V_FC12_B)
    h = h + x                                  # "+ text_embeds" in fuse_fn

    # ---- mlp2 (residual) ----
    r = h
    h2 = layernorm(h, vec(_V_LN2_W), vec(_V_LN2_B))
    h2 = mdot(h2, fc21_w_ref) + vec(_V_FC21_B)
    h2 = gelu(h2)
    h2 = mdot(h2, fc22_w_ref) + vec(_V_FC22_B)
    h2 = h2 + r

    fused = layernorm(h2, vec(_V_LNF_W), vec(_V_LNF_B))
    out_ref[...] = fused.astype(out_ref.dtype)


# ------------------------------ Host glue --------------------------------- #
def _round_up(x, m):
    return ((x + m - 1) // m) * m


def _choose_row_tile(n_rows, row_tile):
    """Row tile: multiple of 16 (bf16 sublane packing), <= padded row count,
    and small enough that >= 2 grid steps exist whenever the padded row count
    allows it, so ("parallel",) can shard across both v7x TensorCores."""
    r = _round_up(max(n_rows, 1), 16)
    t = max(16, min(_round_up(row_tile, 16), r))
    if r >= 32:
        t = min(t, _round_up((r + 1) // 2, 16))
    rows_pad = _round_up(r, t)
    return t, rows_pad


def _resident_spec(shape, single_buffer):
    """Constant-index_map (resident) operand.  Single-buffer it when requested
    so it does not occupy 2x VMEM (review: v7x has only 64 MiB)."""
    if single_buffer:
        return pl.BlockSpec(shape, lambda i: (0, 0), pipeline_mode=pl.Buffered(1))
    return pl.BlockSpec(shape, lambda i: (0, 0))


def make_params(key, embed_dim):
    D = embed_dim
    ks = jax.random.split(key, 8)
    scale = 0.02

    def lin(k, fan_in, fan_out):
        kw, kb = jax.random.split(k)
        w = scale * jax.random.normal(kw, (fan_in, fan_out), jnp.float32)   # y = x @ w + b
        b = scale * jax.random.normal(kb, (1, fan_out), jnp.float32)
        return w, b

    params = {}
    params["ln1_w"] = jnp.ones((1, 2 * D), jnp.float32)
    params["ln1_b"] = jnp.zeros((1, 2 * D), jnp.float32)
    params["fc11_w"], params["fc11_b"] = lin(ks[0], 2 * D, D)
    params["fc12_w"], params["fc12_b"] = lin(ks[1], D, D)
    params["ln2_w"] = jnp.ones((1, D), jnp.float32)
    params["ln2_b"] = jnp.zeros((1, D), jnp.float32)
    params["fc21_w"], params["fc21_b"] = lin(ks[2], D, D)
    params["fc22_w"], params["fc22_b"] = lin(ks[3], D, D)
    params["lnf_w"] = jnp.ones((1, D), jnp.float32)
    params["lnf_b"] = jnp.zeros((1, D), jnp.float32)
    return params


def _prepare_params(params, D, matmul_dtype=jnp.bfloat16):
    """Pack the 12 (1, D) LN/bias vectors into one (16, D) f32 operand and
    pre-cast the five (D, D) matmul weights to bf16 (MXU-native; halves their
    DMA and resident VMEM).  fc11 is split so the [text, obj] concat is never
    materialized."""
    rows = jnp.concatenate([
        params["ln1_w"][:, :D], params["ln1_b"][:, :D],
        params["ln1_w"][:, D:], params["ln1_b"][:, D:],
        params["fc11_b"], params["fc12_b"],
        params["ln2_w"], params["ln2_b"],
        params["fc21_b"], params["fc22_b"],
        params["lnf_w"], params["lnf_b"],
    ], axis=0).astype(jnp.float32)
    vecs = jnp.zeros((_NUM_VEC_ROWS, D), jnp.float32).at[:rows.shape[0]].set(rows)
    weights = {
        "fc11_wa": params["fc11_w"][:D, :].astype(matmul_dtype),
        "fc11_wb": params["fc11_w"][D:, :].astype(matmul_dtype),
        "fc12_w": params["fc12_w"].astype(matmul_dtype),
        "fc21_w": params["fc21_w"].astype(matmul_dtype),
        "fc22_w": params["fc22_w"].astype(matmul_dtype),
    }
    return vecs, weights


@functools.partial(jax.jit, static_argnames=("row_tile", "approximate_gelu",
                                             "single_buffer_weights"))
def _postfuse_forward(text_embeds, object_embeds, image_token_mask, num_objects,
                      params, *, row_tile, approximate_gelu,
                      single_buffer_weights):
    B, S, D = text_embeds.shape
    _, M, T, _ = object_embeds.shape
    N = B * S
    dtype = text_embeds.dtype

    # Static upper bound on fused rows: every valid object token consumes
    # exactly one image token, so K <= min(B*M*T, B*S).
    k_max = min(B * M * T, N)
    tm, rows_pad = _choose_row_tile(k_max, row_tile)
    grid = (rows_pad // tm,)

    text_flat = text_embeds.reshape(N, D)
    mask_flat = image_token_mask.reshape(N).astype(jnp.bool_)

    # -- compact the image-token rows (flat order) --------------------------
    rank_img = jnp.cumsum(mask_flat.astype(jnp.int32)) - 1            # (N,)
    pos = jnp.full((k_max,), N, jnp.int32)                            # N = unused
    pos = pos.at[jnp.where(mask_flat, rank_img, k_max)].set(
        jnp.arange(N, dtype=jnp.int32), mode="drop")
    img_text = text_flat[jnp.clip(pos, 0, N - 1)]                     # (k_max, D)

    # -- compact the valid object tokens (flat order; same global pairing as
    #    torch boolean indexing + masked_scatter_) ---------------------------
    obj_flat = object_embeds.reshape(B * M * T, D).astype(dtype)
    valid_obj = jnp.arange(M, dtype=jnp.int32)[None, :] < num_objects[:, None]
    valid_tok = jnp.broadcast_to(valid_obj[:, :, None], (B, M, T)).reshape(-1)
    rank_obj = jnp.cumsum(valid_tok.astype(jnp.int32)) - 1
    obj_rows = jnp.zeros((k_max, D), dtype)
    obj_rows = obj_rows.at[jnp.where(valid_tok, rank_obj, k_max)].set(
        obj_flat, mode="drop")

    pad = rows_pad - k_max
    if pad:
        img_text = jnp.pad(img_text, ((0, pad), (0, 0)))
        obj_rows = jnp.pad(obj_rows, ((0, pad), (0, 0)))

    vecs, weights = _prepare_params(params, D)

    # -- BlockSpecs ----------------------------------------------------------
    stream_spec = pl.BlockSpec((tm, D), lambda i: (i, 0))
    vec_spec = _resident_spec((_NUM_VEC_ROWS, D), single_buffer_weights)
    w_specs = [_resident_spec((D, D), single_buffer_weights) for _ in range(5)]

    # -- VMEM budget: streams (2-deep) + resident weights + f32/bf16 temps,
    #    clamped to 85% of physical VMEM (v7x: ~54 MiB of 64; v5e/v6e: ~109).
    ebytes = jnp.dtype(dtype).itemsize
    wb = 1 if single_buffer_weights else 2
    stream_bytes = 2 * tm * D * ebytes * 3
    weight_bytes = wb * (5 * D * D * 2 + _NUM_VEC_ROWS * D * 4)
    temp_bytes = 14 * tm * D * 4
    est = stream_bytes + weight_bytes + temp_bytes
    try:
        cap = int(0.85 * pltpu.get_tpu_info().vmem_capacity_bytes)
    except Exception:
        cap = 48 * 1024 * 1024
    vmem_limit = int(min(max(est * 5 // 4, 32 * 1024 * 1024), cap))

    kernel = functools.partial(_fuse_kernel, approximate_gelu=approximate_gelu)
    fused = pl.pallas_call(
        kernel,
        out_shape=jax.ShapeDtypeStruct((rows_pad, D), dtype),
        grid=grid,
        in_specs=[stream_spec, stream_spec, vec_spec] + w_specs,
        out_specs=pl.BlockSpec((tm, D), lambda i: (i, 0)),
        compiler_params=pltpu.CompilerParams(
            dimension_semantics=("parallel",),
            vmem_limit_bytes=vmem_limit),
    )(img_text, obj_rows, vecs,
      weights["fc11_wa"], weights["fc11_wb"], weights["fc12_w"],
      weights["fc21_w"], weights["fc22_w"])

    # -- scatter fused rows back; untouched rows stay bit-exact --------------
    # TODO(synk): for very large k_max the gather/scatter could be fused into
    # the kernel via PrefetchScalarGridSpec row indices + input_output_aliases;
    # not worth it for typical prompt sizes.
    out_flat = text_flat.at[pos].set(fused[:k_max], mode="drop")
    return out_flat.reshape(B, S, D)


def postfuse_forward(text_embeds, object_embeds, image_token_mask, num_objects,
                     params, row_tile=256, approximate_gelu=False):
    try:
        return _postfuse_forward(text_embeds, object_embeds, image_token_mask,
                                 num_objects, params, row_tile=row_tile,
                                 approximate_gelu=approximate_gelu,
                                 single_buffer_weights=True)
    except Exception:
        # pipeline_mode=pl.Buffered(1) unsupported by this JAX/libtpu combo:
        # fall back to default double-buffered resident weights.
        return _postfuse_forward(text_embeds, object_embeds, image_token_mask,
                                 num_objects, params, row_tile=row_tile,
                                 approximate_gelu=approximate_gelu,
                                 single_buffer_weights=False)


# --------------------------- Pure-JAX reference ---------------------------- #
def _reference_forward(text_embeds, object_embeds, image_token_mask, num_objects,
                       params):
    B, S, D = text_embeds.shape
    _, M, T, _ = object_embeds.shape

    def ln(v, w, b):
        mu = jnp.mean(v, -1, keepdims=True)
        var = jnp.mean((v - mu) ** 2, -1, keepdims=True)
        return (v - mu) / jnp.sqrt(var + LN_EPS) * w + b

    def gelu(v):
        return 0.5 * v * (1.0 + jax.lax.erf(v * _INV_SQRT2))

    def fuse_fn(t, o):
        x = jnp.concatenate([t, o], -1)
        h = ln(x, params["ln1_w"], params["ln1_b"])
        h = gelu(h @ params["fc11_w"] + params["fc11_b"])
        h = h @ params["fc12_w"] + params["fc12_b"] + t
        r = h
        h2 = ln(h, params["ln2_w"], params["ln2_b"])
        h2 = gelu(h2 @ params["fc21_w"] + params["fc21_b"])
        h2 = h2 @ params["fc22_w"] + params["fc22_b"] + r
        return ln(h2, params["lnf_w"], params["lnf_b"])

    te = np.asarray(text_embeds, np.float32).reshape(-1, D)
    oe = np.asarray(object_embeds, np.float32)
    mask = np.asarray(image_token_mask).reshape(-1).astype(bool)
    nobj = np.asarray(num_objects)
    valid = [oe[b, m, t] for b in range(B) for m in range(int(nobj[b]))
             for t in range(T)]
    valid = np.stack(valid, 0) if valid else np.zeros((0, D), np.float32)
    fused = np.asarray(fuse_fn(jnp.asarray(te[mask]), jnp.asarray(valid)))
    out = te.copy()
    out[mask] = fused
    return out.reshape(B, S, D)


# --------------------------------- Demo ------------------------------------ #
if __name__ == "__main__":
    B, S, D = 2, 8, 32        # batch, seq, embed_dim
    M, T = 2, 1               # max_num_objects, tokens per object

    key = jax.random.PRNGKey(0)
    k_text, k_obj, k_params = jax.random.split(key, 3)

    text_embeds = jax.random.normal(k_text, (B, S, D), jnp.float32)
    object_embeds = jax.random.normal(k_obj, (B, M, T, D), jnp.float32)
    num_objects = jnp.array([2, 1], jnp.int32)

    # total image tokens (3) == total valid object tokens ((2 + 1) * T)
    image_token_mask = jnp.zeros((B, S), jnp.bool_)
    image_token_mask = image_token_mask.at[0, 2].set(True)
    image_token_mask = image_token_mask.at[0, 5].set(True)
    image_token_mask = image_token_mask.at[1, 3].set(True)

    params = make_params(k_params, D)

    out = postfuse_forward(text_embeds, object_embeds, image_token_mask,
                           num_objects, params)
    jax.block_until_ready(out)
    assert out.shape == (B, S, D)

    np_out = np.asarray(out)
    np_mask = np.asarray(image_token_mask)
    # Non-image rows must be bit-exact pass-through (never touched).
    assert np.array_equal(np_out[~np_mask], np.asarray(text_embeds)[~np_mask])
    # Fused rows match the f32 reference within bf16-matmul tolerance.
    ref = _reference_forward(text_embeds, object_embeds, image_token_mask,
                             num_objects, params)
    assert float(np.max(np.abs(np_out - ref))) < 2e-2

    print("KERNEL_OK")
</pallas_src>

<mosaic_0001>
module attributes {stable_mosaic.version = 11 : i64} {
  func.func @_fuse_kernel(%arg0: i32, %arg1: memref<16x32xf32, #tpu.memory_space<vmem>>, %arg2: memref<16x32xf32, #tpu.memory_space<vmem>>, %arg3: memref<16x32xf32, #tpu.memory_space<vmem>>, %arg4: memref<32x32xbf16, #tpu.memory_space<vmem>>, %arg5: memref<32x32xbf16, #tpu.memory_space<vmem>>, %arg6: memref<32x32xbf16, #tpu.memory_space<vmem>>, %arg7: memref<32x32xbf16, #tpu.memory_space<vmem>>, %arg8: memref<32x32xbf16, #tpu.memory_space<vmem>>, %arg9: memref<16x32xf32, #tpu.memory_space<vmem>>) attributes {dimension_semantics = [#tpu.dimension_semantics<parallel>], iteration_bounds = array<i64: 1>, scalar_prefetch = 0 : i64, scratch_operands = 0 : i64, tpu.core_type = #tpu.core_type<tc>, window_params = [{transform_indices = @transform_0, window_bounds = array<i64: 16, 32>}, {transform_indices = @transform_1, window_bounds = array<i64: 16, 32>}, {pipeline_mode = #tpu.pipeline_mode<synchronous>, transform_indices = @transform_2, window_bounds = array<i64: 16, 32>}, {pipeline_mode = #tpu.pipeline_mode<synchronous>, transform_indices = @transform_3, window_bounds = array<i64: 32, 32>}, {pipeline_mode = #tpu.pipeline_mode<synchronous>, transform_indices = @transform_4, window_bounds = array<i64: 32, 32>}, {pipeline_mode = #tpu.pipeline_mode<synchronous>, transform_indices = @transform_5, window_bounds = array<i64: 32, 32>}, {pipeline_mode = #tpu.pipeline_mode<synchronous>, transform_indices = @transform_6, window_bounds = array<i64: 32, 32>}, {pipeline_mode = #tpu.pipeline_mode<synchronous>, transform_indices = @transform_7, window_bounds = array<i64: 32, 32>}, {transform_indices = @transform_8, window_bounds = array<i64: 16, 32>}]} {
    %c0 = arith.constant 0 : index
    %c0_0 = arith.constant 0 : index
    %0 = vector.load %arg1[%c0, %c0_0] : memref<16x32xf32, #tpu.memory_space<vmem>>, vector<16x32xf32>
    %c0_1 = arith.constant 0 : index
    %c0_2 = arith.constant 0 : index
    %1 = vector.load %arg2[%c0_1, %c0_2] : memref<16x32xf32, #tpu.memory_space<vmem>>, vector<16x32xf32>
    %cst = arith.constant dense<0.000000e+00> : vector<16xf32>
    %2 = vector.multi_reduction <add>, %0, %cst [1] : vector<16x32xf32> to vector<16xf32>
    %3 = vector.shape_cast %2 : vector<16xf32> to vector<16x1xf32>
    %cst_3 = arith.constant dense<0.000000e+00> : vector<16xf32>
    %4 = vector.multi_reduction <add>, %1, %cst_3 [1] : vector<16x32xf32> to vector<16xf32>
    %5 = vector.shape_cast %4 : vector<16xf32> to vector<16x1xf32>
    %6 = arith.addf %3, %5 : vector<16x1xf32>
    %cst_4 = arith.constant 1.562500e-02 : f32
    %7 = vector.broadcast %cst_4 : f32 to vector<16x1xf32>
    %8 = arith.mulf %6, %7 : vector<16x1xf32>
    %9 = vector.broadcast %8 : vector<16x1xf32> to vector<16x32xf32>
    %10 = arith.subf %0, %9 : vector<16x32xf32>
    %11 = vector.broadcast %8 : vector<16x1xf32> to vector<16x32xf32>
    %12 = arith.subf %1, %11 : vector<16x32xf32>
    %13 = arith.mulf %10, %10 : vector<16x32xf32>
    %cst_5 = arith.constant dense<0.000000e+00> : vector<16xf32>
    %14 = vector.multi_reduction <add>, %13, %cst_5 [1] : vector<16x32xf32> to vector<16xf32>
    %15 = vector.shape_cast %14 : vector<16xf32> to vector<16x1xf32>
    %16 = arith.mulf %12, %12 : vector<16x32xf32>
    %cst_6 = arith.constant dense<0.000000e+00> : vector<16xf32>
    %17 = vector.multi_reduction <add>, %16, %cst_6 [1] : vector<16x32xf32> to vector<16xf32>
    %18 = vector.shape_cast %17 : vector<16xf32> to vector<16x1xf32>
    %19 = arith.addf %15, %18 : vector<16x1xf32>
    %cst_7 = arith.constant 1.562500e-02 : f32
    %20 = vector.broadcast %cst_7 : f32 to vector<16x1xf32>
    %21 = arith.mulf %19, %20 : vector<16x1xf32>
    %cst_8 = arith.constant 9.99999974E-6 : f32
    %22 = vector.broadcast %cst_8 : f32 to vector<16x1xf32>
    %23 = arith.addf %21, %22 : vector<16x1xf32>
    %24 = math.rsqrt %23 : vector<16x1xf32>
    %25 = vector.broadcast %24 : vector<16x1xf32> to vector<16x32xf32>
    %26 = arith.mulf %10, %25 : vector<16x32xf32>
    %c0_9 = arith.constant 0 : index
    %c0_10 = arith.constant 0 : index
    %27 = vector.load %arg3[%c0_9, %c0_10] : memref<16x32xf32, #tpu.memory_space<vmem>>, vector<1x32xf32>
    %28 = vector.broadcast %27 : vector<1x32xf32> to vector<16x32xf32>
    %29 = arith.mulf %26, %28 : vector<16x32xf32>
    %c1 = arith.constant 1 : index
    %c0_11 = arith.constant 0 : index
    %30 = vector.load %arg3[%c1, %c0_11] : memref<16x32xf32, #tpu.memory_space<vmem>>, vector<1x32xf32>
    %31 = vector.broadcast %30 : vector<1x32xf32> to vector<16x32xf32>
    %32 = arith.addf %29, %31 : vector<16x32xf32>
    %33 = vector.broadcast %24 : vector<16x1xf32> to vector<16x32xf32>
    %34 = arith.mulf %12, %33 : vector<16x32xf32>
    %c2 = arith.constant 2 : index
    %c0_12 = arith.constant 0 : index
    %35 = vector.load %arg3[%c2, %c0_12] : memref<16x32xf32, #tpu.memory_space<vmem>>, vector<1x32xf32>
    %36 = vector.broadcast %35 : vector<1x32xf32> to vector<16x32xf32>
    %37 = arith.mulf %34, %36 : vector<16x32xf32>
    %c3 = arith.constant 3 : index
    %c0_13 = arith.constant 0 : index
    %38 = vector.load %arg3[%c3, %c0_13] : memref<16x32xf32, #tpu.memory_space<vmem>>, vector<1x32xf32>
    %39 = vector.broadcast %38 : vector<1x32xf32> to vector<16x32xf32>
    %40 = arith.addf %37, %39 : vector<16x32xf32>
    %41 = arith.truncf %32 : vector<16x32xf32> to vector<16x32xbf16>
    %c0_14 = arith.constant 0 : index
    %c0_15 = arith.constant 0 : index
    %42 = vector.load %arg4[%c0_14, %c0_15] : memref<32x32xbf16, #tpu.memory_space<vmem>>, vector<32x32xbf16>
    %cst_16 = arith.constant dense<0.000000e+00> : vector<16x32xf32>
    %43 = tpu.matmul %41, %42, %cst_16 {dimension_numbers = #tpu.dot_dimension_numbers<[1], [0], [0], [1], [0, 0, 1, 1], [], []>} : vector<16x32xbf16>, vector<32x32xbf16>, vector<16x32xf32> -> vector<16x32xf32>
    %44 = arith.truncf %40 : vector<16x32xf32> to vector<16x32xbf16>
    %c0_17 = arith.constant 0 : index
    %c0_18 = arith.constant 0 : index
    %45 = vector.load %arg5[%c0_17, %c0_18] : memref<32x32xbf16, #tpu.memory_space<vmem>>, vector<32x32xbf16>
    %cst_19 = arith.constant dense<0.000000e+00> : vector<16x32xf32>
    %46 = tpu.matmul %44, %45, %cst_19 {dimension_numbers = #tpu.dot_dimension_numbers<[1], [0], [0], [1], [0, 0, 1, 1], [], []>} : vector<16x32xbf16>, vector<32x32xbf16>, vector<16x32xf32> -> vector<16x32xf32>
    %47 = arith.addf %43, %46 : vector<16x32xf32>
    %c4 = arith.constant 4 : index
    %c0_20 = arith.constant 0 : index
    %48 = vector.load %arg3[%c4, %c0_20] : memref<16x32xf32, #tpu.memory_space<vmem>>, vector<1x32xf32>
    %49 = vector.broadcast %48 : vector<1x32xf32> to vector<16x32xf32>
    %50 = arith.addf %47, %49 : vector<16x32xf32>
    %cst_21 = arith.constant 5.000000e-01 : f32
    %51 = vector.broadcast %cst_21 : f32 to vector<16x32xf32>
    %52 = arith.mulf %51, %50 : vector<16x32xf32>
    %cst_22 = arith.constant 0.707106769 : f32
    %53 = vector.broadcast %cst_22 : f32 to vector<16x32xf32>
    %54 = arith.mulf %50, %53 : vector<16x32xf32>
    %55 = math.erf %54 : vector<16x32xf32>
    %cst_23 = arith.constant 1.000000e+00 : f32
    %56 = vector.broadcast %cst_23 : f32 to vector<16x32xf32>
    %57 = arith.addf %56, %55 : vector<16x32xf32>
    %58 = arith.mulf %52, %57 : vector<16x32xf32>
    %59 = arith.truncf %58 : vector<16x32xf32> to vector<16x32xbf16>
    %c0_24 = arith.constant 0 : index
    %c0_25 = arith.constant 0 : index
    %60 = vector.load %arg6[%c0_24, %c0_25] : memref<32x32xbf16, #tpu.memory_space<vmem>>, vector<32x32xbf16>
    %cst_26 = arith.constant dense<0.000000e+00> : vector<16x32xf32>
    %61 = tpu.matmul %59, %60, %cst_26 {dimension_numbers = #tpu.dot_dimension_numbers<[1], [0], [0], [1], [0, 0, 1, 1], [], []>} : vector<16x32xbf16>, vector<32x32xbf16>, vector<16x32xf32> -> vector<16x32xf32>
    %c5 = arith.constant 5 : index
    %c0_27 = arith.constant 0 : index
    %62 = vector.load %arg3[%c5, %c0_27] : memref<16x32xf32, #tpu.memory_space<vmem>>, vector<1x32xf32>
    %63 = vector.broadcast %62 : vector<1x32xf32> to vector<16x32xf32>
    %64 = arith.addf %61, %63 : vector<16x32xf32>
    %65 = arith.addf %64, %0 : vector<16x32xf32>
    %c6 = arith.constant 6 : index
    %c0_28 = arith.constant 0 : index
    %66 = vector.load %arg3[%c6, %c0_28] : memref<16x32xf32, #tpu.memory_space<vmem>>, vector<1x32xf32>
    %c7 = arith.constant 7 : index
    %c0_29 = arith.constant 0 : index
    %67 = vector.load %arg3[%c7, %c0_29] : memref<16x32xf32, #tpu.memory_space<vmem>>, vector<1x32xf32>
    %cst_30 = arith.constant dense<0.000000e+00> : vector<16xf32>
    %68 = vector.multi_reduction <add>, %65, %cst_30 [1] : vector<16x32xf32> to vector<16xf32>
    %69 = vector.shape_cast %68 : vector<16xf32> to vector<16x1xf32>
    %cst_31 = arith.constant 3.200000e+01 : f32
    %70 = vector.broadcast %cst_31 : f32 to vector<16x1xf32>
    %71 = arith.divf %69, %70 : vector<16x1xf32>
    %72 = vector.broadcast %71 : vector<16x1xf32> to vector<16x32xf32>
    %73 = arith.subf %65, %72 : vector<16x32xf32>
    %74 = arith.mulf %73, %73 : vector<16x32xf32>
    %cst_32 = arith.constant dense<0.000000e+00> : vector<16xf32>
    %75 = vector.multi_reduction <add>, %74, %cst_32 [1] : vector<16x32xf32> to vector<16xf32>
    %76 = vector.shape_cast %75 : vector<16xf32> to vector<16x1xf32>
    %cst_33 = arith.constant 3.200000e+01 : f32
    %77 = vector.broadcast %cst_33 : f32 to vector<16x1xf32>
    %78 = arith.divf %76, %77 : vector<16x1xf32>
    %79 = vector.broadcast %71 : vector<16x1xf32> to vector<16x32xf32>
    %80 = arith.subf %65, %79 : vector<16x32xf32>
    %cst_34 = arith.constant 9.99999974E-6 : f32
    %81 = vector.broadcast %cst_34 : f32 to vector<16x1xf32>
    %82 = arith.addf %78, %81 : vector<16x1xf32>
    %83 = math.rsqrt %82 : vector<16x1xf32>
    %84 = vector.broadcast %83 : vector<16x1xf32> to vector<16x32xf32>
    %85 = arith.mulf %80, %84 : vector<16x32xf32>
    %86 = vector.broadcast %66 : vector<1x32xf32> to vector<16x32xf32>
    %87 = arith.mulf %85, %86 : vector<16x32xf32>
    %88 = vector.broadcast %67 : vector<1x32xf32> to vector<16x32xf32>
    %89 = arith.addf %87, %88 : vector<16x32xf32>
    %90 = arith.truncf %89 : vector<16x32xf32> to vector<16x32xbf16>
    %c0_35 = arith.constant 0 : index
    %c0_36 = arith.constant 0 : index
    %91 = vector.load %arg7[%c0_35, %c0_36] : memref<32x32xbf16, #tpu.memory_space<vmem>>, vector<32x32xbf16>
    %cst_37 = arith.constant dense<0.000000e+00> : vector<16x32xf32>
    %92 = tpu.matmul %90, %91, %cst_37 {dimension_numbers = #tpu.dot_dimension_numbers<[1], [0], [0], [1], [0, 0, 1, 1], [], []>} : vector<16x32xbf16>, vector<32x32xbf16>, vector<16x32xf32> -> vector<16x32xf32>
    %c8 = arith.constant 8 : index
    %c0_38 = arith.constant 0 : index
    %93 = vector.load %arg3[%c8, %c0_38] : memref<16x32xf32, #tpu.memory_space<vmem>>, vector<1x32xf32>
    %94 = vector.broadcast %93 : vector<1x32xf32> to vector<16x32xf32>
    %95 = arith.addf %92, %94 : vector<16x32xf32>
    %cst_39 = arith.constant 5.000000e-01 : f32
    %96 = vector.broadcast %cst_39 : f32 to vector<16x32xf32>
    %97 = arith.mulf %96, %95 : vector<16x32xf32>
    %cst_40 = arith.constant 0.707106769 : f32
    %98 = vector.broadcast %cst_40 : f32 to vector<16x32xf32>
    %99 = arith.mulf %95, %98 : vector<16x32xf32>
    %100 = math.erf %99 : vector<16x32xf32>
    %cst_41 = arith.constant 1.000000e+00 : f32
    %101 = vector.broadcast %cst_41 : f32 to vector<16x32xf32>
    %102 = arith.addf %101, %100 : vector<16x32xf32>
    %103 = arith.mulf %97, %102 : vector<16x32xf32>
    %104 = arith.truncf %103 : vector<16x32xf32> to vector<16x32xbf16>
    %c0_42 = arith.constant 0 : index
    %c0_43 = arith.constant 0 : index
    %105 = vector.load %arg8[%c0_42, %c0_43] : memref<32x32xbf16, #tpu.memory_space<vmem>>, vector<32x32xbf16>
    %cst_44 = arith.constant dense<0.000000e+00> : vector<16x32xf32>
    %106 = tpu.matmul %104, %105, %cst_44 {dimension_numbers = #tpu.dot_dimension_numbers<[1], [0], [0], [1], [0, 0, 1, 1], [], []>} : vector<16x32xbf16>, vector<32x32xbf16>, vector<16x32xf32> -> vector<16x32xf32>
    %c9 = arith.constant 9 : index
    %c0_45 = arith.constant 0 : index
    %107 = vector.load %arg3[%c9, %c0_45] : memref<16x32xf32, #tpu.memory_space<vmem>>, vector<1x32xf32>
    %108 = vector.broadcast %107 : vector<1x32xf32> to vector<16x32xf32>
    %109 = arith.addf %106, %108 : vector<16x32xf32>
    %110 = arith.addf %109, %65 : vector<16x32xf32>
    %c10 = arith.constant 10 : index
    %c0_46 = arith.constant 0 : index
    %111 = vector.load %arg3[%c10, %c0_46] : memref<16x32xf32, #tpu.memory_space<vmem>>, vector<1x32xf32>
    %c11 = arith.constant 11 : index
    %c0_47 = arith.constant 0 : index
    %112 = vector.load %arg3[%c11, %c0_47] : memref<16x32xf32, #tpu.memory_space<vmem>>, vector<1x32xf32>
    %cst_48 = arith.constant dense<0.000000e+00> : vector<16xf32>
    %113 = vector.multi_reduction <add>, %110, %cst_48 [1] : vector<16x32xf32> to vector<16xf32>
    %114 = vector.shape_cast %113 : vector<16xf32> to vector<16x1xf32>
    %cst_49 = arith.constant 3.200000e+01 : f32
    %115 = vector.broadcast %cst_49 : f32 to vector<16x1xf32>
    %116 = arith.divf %114, %115 : vector<16x1xf32>
    %117 = vector.broadcast %116 : vector<16x1xf32> to vector<16x32xf32>
    %118 = arith.subf %110, %117 : vector<16x32xf32>
    %119 = arith.mulf %118, %118 : vector<16x32xf32>
    %cst_50 = arith.constant dense<0.000000e+00> : vector<16xf32>
    %120 = vector.multi_reduction <add>, %119, %cst_50 [1] : vector<16x32xf32> to vector<16xf32>
    %121 = vector.shape_cast %120 : vector<16xf32> to vector<16x1xf32>
    %cst_51 = arith.constant 3.200000e+01 : f32
    %122 = vector.broadcast %cst_51 : f32 to vector<16x1xf32>
    %123 = arith.divf %121, %122 : vector<16x1xf32>
    %124 = vector.broadcast %116 : vector<16x1xf32> to vector<16x32xf32>
    %125 = arith.subf %110, %124 : vector<16x32xf32>
    %cst_52 = arith.constant 9.99999974E-6 : f32
    %126 = vector.broadcast %cst_52 : f32 to vector<16x1xf32>
    %127 = arith.addf %123, %126 : vector<16x1xf32>
    %128 = math.rsqrt %127 : vector<16x1xf32>
    %129 = vector.broadcast %128 : vector<16x1xf32> to vector<16x32xf32>
    %130 = arith.mulf %125, %129 : vector<16x32xf32>
    %131 = vector.broadcast %111 : vector<1x32xf32> to vector<16x32xf32>
    %132 = arith.mulf %130, %131 : vector<16x32xf32>
    %133 = vector.broadcast %112 : vector<1x32xf32> to vector<16x32xf32>
    %134 = arith.addf %132, %133 : vector<16x32xf32>
    %c0_53 = arith.constant 0 : index
    %c0_54 = arith.constant 0 : index
    %135 = vector.load %arg9[%c0_53, %c0_54] : memref<16x32xf32, #tpu.memory_space<vmem>>, vector<16x32xf32>
    tpu.vector_store %arg9[%c0_53, %c0_54], %134 {strides = array<i32>} : memref<16x32xf32, #tpu.memory_space<vmem>>, vector<16x32xf32>,
    return
  }
  func.func @transform_0(%arg0: i32) -> (i32, i32) {
    %c0_i32 = arith.constant 0 : i32
    %c0_i32_0 = arith.constant 0 : i32
    return %arg0, %c0_i32 : i32, i32
  }
  func.func @transform_1(%arg0: i32) -> (i32, i32) {
    %c0_i32 = arith.constant 0 : i32
    %c0_i32_0 = arith.constant 0 : i32
    return %arg0, %c0_i32 : i32, i32
  }
  func.func @transform_2(%arg0: i32) -> (i32, i32) {
    %c0_i32 = arith.constant 0 : i32
    %c0_i32_0 = arith.constant 0 : i32
    %c0_i32_1 = arith.constant 0 : i32
    return %c0_i32, %c0_i32_0 : i32, i32
  }
  func.func @transform_3(%arg0: i32) -> (i32, i32) {
    %c0_i32 = arith.constant 0 : i32
    %c0_i32_0 = arith.constant 0 : i32
    %c0_i32_1 = arith.constant 0 : i32
    return %c0_i32, %c0_i32_0 : i32, i32
  }
  func.func @transform_4(%arg0: i32) -> (i32, i32) {
    %c0_i32 = arith.constant 0 : i32
    %c0_i32_0 = arith.constant 0 : i32
    %c0_i32_1 = arith.constant 0 : i32
    return %c0_i32, %c0_i32_0 : i32, i32
  }
  func.func @transform_5(%arg0: i32) -> (i32, i32) {
    %c0_i32 = arith.constant 0 : i32
    %c0_i32_0 = arith.constant 0 : i32
    %c0_i32_1 = arith.constant 0 : i32
    return %c0_i32, %c0_i32_0 : i32, i32
  }
  func.func @transform_6(%arg0: i32) -> (i32, i32) {
    %c0_i32 = arith.constant 0 : i32
    %c0_i32_0 = arith.constant 0 : i32
    %c0_i32_1 = arith.constant 0 : i32
    return %c0_i32, %c0_i32_0 : i32, i32
  }
  func.func @transform_7(%arg0: i32) -> (i32, i32) {
    %c0_i32 = arith.constant 0 : i32
    %c0_i32_0 = arith.constant 0 : i32
    %c0_i32_1 = arith.constant 0 : i32
    return %c0_i32, %c0_i32_0 : i32, i32
  }
  func.func @transform_8(%arg0: i32) -> (i32, i32) {
    %c0_i32 = arith.constant 0 : i32
    %c0_i32_0 = arith.constant 0 : i32
    return %arg0, %c0_i32 : i32, i32
  }
}

module attributes {stable_mosaic.version = 11 : i64} {
  func.func @_fuse_kernel(%arg0: i32, %arg1: memref<16x32xf32, #tpu.memory_space<vmem>>, %arg2: memref<16x32xf32, #tpu.memory_space<vmem>>, %arg3: memref<16x32xf32, #tpu.memory_space<vmem>>, %arg4: memref<32x32xbf16, #tpu.memory_space<vmem>>, %arg5: memref<32x32xbf16, #tpu.memory_space<vmem>>, %arg6: memref<32x32xbf16, #tpu.memory_space<vmem>>, %arg7: memref<32x32xbf16, #tpu.memory_space<vmem>>, %arg8: memref<32x32xbf16, #tpu.memory_space<vmem>>, %arg9: memref<16x32xf32, #tpu.memory_space<vmem>>) attributes {dimension_semantics = [#tpu.dimension_semantics<parallel>], iteration_bounds = array<i64: 1>, scalar_prefetch = 0 : i64, scratch_operands = 0 : i64, tpu.core_type = #tpu.core_type<tc>, window_params = [{transform_indices = @transform_0, window_bounds = array<i64: 16, 32>}, {transform_indices = @transform_1, window_bounds = array<i64: 16, 32>}, {pipeline_mode = #tpu.pipeline_mode<synchronous>, transform_indices = @transform_2, window_bounds = array<i64: 16, 32>}, {pipeline_mode = #tpu.pipeline_mode<synchronous>, transform_indices = @transform_3, window_bounds = array<i64: 32, 32>}, {pipeline_mode = #tpu.pipeline_mode<synchronous>, transform_indices = @transform_4, window_bounds = array<i64: 32, 32>}, {pipeline_mode = #tpu.pipeline_mode<synchronous>, transform_indices = @transform_5, window_bounds = array<i64: 32, 32>}, {pipeline_mode = #tpu.pipeline_mode<synchronous>, transform_indices = @transform_6, window_bounds = array<i64: 32, 32>}, {pipeline_mode = #tpu.pipeline_mode<synchronous>, transform_indices = @transform_7, window_bounds = array<i64: 32, 32>}, {transform_indices = @transform_8, window_bounds = array<i64: 16, 32>}]} {
    %c0 = arith.constant 0 : index
    %c0_0 = arith.constant 0 : index
    %0 = vector.load %arg1[%c0, %c0_0] : memref<16x32xf32, #tpu.memory_space<vmem>>, vector<16x32xf32>
    %c0_1 = arith.constant 0 : index
    %c0_2 = arith.constant 0 : index
    %1 = vector.load %arg2[%c0_1, %c0_2] : memref<16x32xf32, #tpu.memory_space<vmem>>, vector<16x32xf32>
    %cst = arith.constant dense<0.000000e+00> : vector<16xf32>
    %2 = vector.multi_reduction <add>, %0, %cst [1] : vector<16x32xf32> to vector<16xf32>
    %3 = vector.shape_cast %2 : vector<16xf32> to vector<16x1xf32>
    %cst_3 = arith.constant dense<0.000000e+00> : vector<16xf32>
    %4 = vector.multi_reduction <add>, %1, %cst_3 [1] : vector<16x32xf32> to vector<16xf32>
    %5 = vector.shape_cast %4 : vector<16xf32> to vector<16x1xf32>
    %6 = arith.addf %3, %5 : vector<16x1xf32>
    %cst_4 = arith.constant 1.562500e-02 : f32
    %7 = vector.broadcast %cst_4 : f32 to vector<16x1xf32>
    %8 = arith.mulf %6, %7 : vector<16x1xf32>
    %9 = vector.broadcast %8 : vector<16x1xf32> to vector<16x32xf32>
    %10 = arith.subf %0, %9 : vector<16x32xf32>
    %11 = vector.broadcast %8 : vector<16x1xf32> to vector<16x32xf32>
    %12 = arith.subf %1, %11 : vector<16x32xf32>
    %13 = arith.mulf %10, %10 : vector<16x32xf32>
    %cst_5 = arith.constant dense<0.000000e+00> : vector<16xf32>
    %14 = vector.multi_reduction <add>, %13, %cst_5 [1] : vector<16x32xf32> to vector<16xf32>
    %15 = vector.shape_cast %14 : vector<16xf32> to vector<16x1xf32>
    %16 = arith.mulf %12, %12 : vector<16x32xf32>
    %cst_6 = arith.constant dense<0.000000e+00> : vector<16xf32>
    %17 = vector.multi_reduction <add>, %16, %cst_6 [1] : vector<16x32xf32> to vector<16xf32>
    %18 = vector.shape_cast %17 : vector<16xf32> to vector<16x1xf32>
    %19 = arith.addf %15, %18 : vector<16x1xf32>
    %cst_7 = arith.constant 1.562500e-02 : f32
    %20 = vector.broadcast %cst_7 : f32 to vector<16x1xf32>
    %21 = arith.mulf %19, %20 : vector<16x1xf32>
    %cst_8 = arith.constant 9.99999974E-6 : f32
    %22 = vector.broadcast %cst_8 : f32 to vector<16x1xf32>
    %23 = arith.addf %21, %22 : vector<16x1xf32>
    %24 = math.rsqrt %23 : vector<16x1xf32>
    %25 = vector.broadcast %24 : vector<16x1xf32> to vector<16x32xf32>
    %26 = arith.mulf %10, %25 : vector<16x32xf32>
    %c0_9 = arith.constant 0 : index
    %c0_10 = arith.constant 0 : index
    %27 = vector.load %arg3[%c0_9, %c0_10] : memref<16x32xf32, #tpu.memory_space<vmem>>, vector<1x32xf32>
    %28 = vector.broadcast %27 : vector<1x32xf32> to vector<16x32xf32>
    %29 = arith.mulf %26, %28 : vector<16x32xf32>
    %c1 = arith.constant 1 : index
    %c0_11 = arith.constant 0 : index
    %30 = vector.load %arg3[%c1, %c0_11] : memref<16x32xf32, #tpu.memory_space<vmem>>, vector<1x32xf32>
    %31 = vector.broadcast %30 : vector<1x32xf32> to vector<16x32xf32>
    %32 = arith.addf %29, %31 : vector<16x32xf32>
    %33 = vector.broadcast %24 : vector<16x1xf32> to vector<16x32xf32>
    %34 = arith.mulf %12, %33 : vector<16x32xf32>
    %c2 = arith.constant 2 : index
    %c0_12 = arith.constant 0 : index
    %35 = vector.load %arg3[%c2, %c0_12] : memref<16x32xf32, #tpu.memory_space<vmem>>, vector<1x32xf32>
    %36 = vector.broadcast %35 : vector<1x32xf32> to vector<16x32xf32>
    %37 = arith.mulf %34, %36 : vector<16x32xf32>
    %c3 = arith.constant 3 : index
    %c0_13 = arith.constant 0 : index
    %38 = vector.load %arg3[%c3, %c0_13] : memref<16x32xf32, #tpu.memory_space<vmem>>, vector<1x32xf32>
    %39 = vector.broadcast %38 : vector<1x32xf32> to vector<16x32xf32>
    %40 = arith.addf %37, %39 : vector<16x32xf32>
    %41 = arith.truncf %32 : vector<16x32xf32> to vector<16x32xbf16>
    %c0_14 = arith.constant 0 : index
    %c0_15 = arith.constant 0 : index
    %42 = vector.load %arg4[%c0_14, %c0_15] : memref<32x32xbf16, #tpu.memory_space<vmem>>, vector<32x32xbf16>
    %cst_16 = arith.constant dense<0.000000e+00> : vector<16x32xf32>
    %43 = tpu.matmul %41, %42, %cst_16 {dimension_numbers = #tpu.dot_dimension_numbers<[1], [0], [0], [1], [0, 0, 1, 1], [], []>} : vector<16x32xbf16>, vector<32x32xbf16>, vector<16x32xf32> -> vector<16x32xf32>
    %44 = arith.truncf %40 : vector<16x32xf32> to vector<16x32xbf16>
    %c0_17 = arith.constant 0 : index
    %c0_18 = arith.constant 0 : index
    %45 = vector.load %arg5[%c0_17, %c0_18] : memref<32x32xbf16, #tpu.memory_space<vmem>>, vector<32x32xbf16>
    %cst_19 = arith.constant dense<0.000000e+00> : vector<16x32xf32>
    %46 = tpu.matmul %44, %45, %cst_19 {dimension_numbers = #tpu.dot_dimension_numbers<[1], [0], [0], [1], [0, 0, 1, 1], [], []>} : vector<16x32xbf16>, vector<32x32xbf16>, vector<16x32xf32> -> vector<16x32xf32>
    %47 = arith.addf %43, %46 : vector<16x32xf32>
    %c4 = arith.constant 4 : index
    %c0_20 = arith.constant 0 : index
    %48 = vector.load %arg3[%c4, %c0_20] : memref<16x32xf32, #tpu.memory_space<vmem>>, vector<1x32xf32>
    %49 = vector.broadcast %48 : vector<1x32xf32> to vector<16x32xf32>
    %50 = arith.addf %47, %49 : vector<16x32xf32>
    %cst_21 = arith.constant 5.000000e-01 : f32
    %51 = vector.broadcast %cst_21 : f32 to vector<16x32xf32>
    %52 = arith.mulf %51, %50 : vector<16x32xf32>
    %cst_22 = arith.constant 0.707106769 : f32
    %53 = vector.broadcast %cst_22 : f32 to vector<16x32xf32>
    %54 = arith.mulf %50, %53 : vector<16x32xf32>
    %55 = math.erf %54 : vector<16x32xf32>
    %cst_23 = arith.constant 1.000000e+00 : f32
    %56 = vector.broadcast %cst_23 : f32 to vector<16x32xf32>
    %57 = arith.addf %56, %55 : vector<16x32xf32>
    %58 = arith.mulf %52, %57 : vector<16x32xf32>
    %59 = arith.truncf %58 : vector<16x32xf32> to vector<16x32xbf16>
    %c0_24 = arith.constant 0 : index
    %c0_25 = arith.constant 0 : index
    %60 = vector.load %arg6[%c0_24, %c0_25] : memref<32x32xbf16, #tpu.memory_space<vmem>>, vector<32x32xbf16>
    %cst_26 = arith.constant dense<0.000000e+00> : vector<16x32xf32>
    %61 = tpu.matmul %59, %60, %cst_26 {dimension_numbers = #tpu.dot_dimension_numbers<[1], [0], [0], [1], [0, 0, 1, 1], [], []>} : vector<16x32xbf16>, vector<32x32xbf16>, vector<16x32xf32> -> vector<16x32xf32>
    %c5 = arith.constant 5 : index
    %c0_27 = arith.constant 0 : index
    %62 = vector.load %arg3[%c5, %c0_27] : memref<16x32xf32, #tpu.memory_space<vmem>>, vector<1x32xf32>
    %63 = vector.broadcast %62 : vector<1x32xf32> to vector<16x32xf32>
    %64 = arith.addf %61, %63 : vector<16x32xf32>
    %65 = arith.addf %64, %0 : vector<16x32xf32>
    %c6 = arith.constant 6 : index
    %c0_28 = arith.constant 0 : index
    %66 = vector.load %arg3[%c6, %c0_28] : memref<16x32xf32, #tpu.memory_space<vmem>>, vector<1x32xf32>
    %c7 = arith.constant 7 : index
    %c0_29 = arith.constant 0 : index
    %67 = vector.load %arg3[%c7, %c0_29] : memref<16x32xf32, #tpu.memory_space<vmem>>, vector<1x32xf32>
    %cst_30 = arith.constant dense<0.000000e+00> : vector<16xf32>
    %68 = vector.multi_reduction <add>, %65, %cst_30 [1] : vector<16x32xf32> to vector<16xf32>
    %69 = vector.shape_cast %68 : vector<16xf32> to vector<16x1xf32>
    %cst_31 = arith.constant 3.200000e+01 : f32
    %70 = vector.broadcast %cst_31 : f32 to vector<16x1xf32>
    %71 = arith.divf %69, %70 : vector<16x1xf32>
    %72 = vector.broadcast %71 : vector<16x1xf32> to vector<16x32xf32>
    %73 = arith.subf %65, %72 : vector<16x32xf32>
    %74 = arith.mulf %73, %73 : vector<16x32xf32>
    %cst_32 = arith.constant dense<0.000000e+00> : vector<16xf32>
    %75 = vector.multi_reduction <add>, %74, %cst_32 [1] : vector<16x32xf32> to vector<16xf32>
    %76 = vector.shape_cast %75 : vector<16xf32> to vector<16x1xf32>
    %cst_33 = arith.constant 3.200000e+01 : f32
    %77 = vector.broadcast %cst_33 : f32 to vector<16x1xf32>
    %78 = arith.divf %76, %77 : vector<16x1xf32>
    %79 = vector.broadcast %71 : vector<16x1xf32> to vector<16x32xf32>
    %80 = arith.subf %65, %79 : vector<16x32xf32>
    %cst_34 = arith.constant 9.99999974E-6 : f32
    %81 = vector.broadcast %cst_34 : f32 to vector<16x1xf32>
    %82 = arith.addf %78, %81 : vector<16x1xf32>
    %83 = math.rsqrt %82 : vector<16x1xf32>
    %84 = vector.broadcast %83 : vector<16x1xf32> to vector<16x32xf32>
    %85 = arith.mulf %80, %84 : vector<16x32xf32>
    %86 = vector.broadcast %66 : vector<1x32xf32> to vector<16x32xf32>
    %87 = arith.mulf %85, %86 : vector<16x32xf32>
    %88 = vector.broadcast %67 : vector<1x32xf32> to vector<16x32xf32>
    %89 = arith.addf %87, %88 : vector<16x32xf32>
    %90 = arith.truncf %89 : vector<16x32xf32> to vector<16x32xbf16>
    %c0_35 = arith.constant 0 : index
    %c0_36 = arith.constant 0 : index
    %91 = vector.load %arg7[%c0_35, %c0_36] : memref<32x32xbf16, #tpu.memory_space<vmem>>, vector<32x32xbf16>
    %cst_37 = arith.constant dense<0.000000e+00> : vector<16x32xf32>
    %92 = tpu.matmul %90, %91, %cst_37 {dimension_numbers = #tpu.dot_dimension_numbers<[1], [0], [0], [1], [0, 0, 1, 1], [], []>} : vector<16x32xbf16>, vector<32x32xbf16>, vector<16x32xf32> -> vector<16x32xf32>
    %c8 = arith.constant 8 : index
    %c0_38 = arith.constant 0 : index
    %93 = vector.load %arg3[%c8, %c0_38] : memref<16x32xf32, #tpu.memory_space<vmem>>, vector<1x32xf32>
    %94 = vector.broadcast %93 : vector<1x32xf32> to vector<16x32xf32>
    %95 = arith.addf %92, %94 : vector<16x32xf32>
    %cst_39 = arith.constant 5.000000e-01 : f32
    %96 = vector.broadcast %cst_39 : f32 to vector<16x32xf32>
    %97 = arith.mulf %96, %95 : vector<16x32xf32>
    %cst_40 = arith.constant 0.707106769 : f32
    %98 = vector.broadcast %cst_40 : f32 to vector<16x32xf32>
    %99 = arith.mulf %95, %98 : vector<16x32xf32>
    %100 = math.erf %99 : vector<16x32xf32>
    %cst_41 = arith.constant 1.000000e+00 : f32
    %101 = vector.broadcast %cst_41 : f32 to vector<16x32xf32>
    %102 = arith.addf %101, %100 : vector<16x32xf32>
    %103 = arith.mulf %97, %102 : vector<16x32xf32>
    %104 = arith.truncf %103 : vector<16x32xf32> to vector<16x32xbf16>
    %c0_42 = arith.constant 0 : index
    %c0_43 = arith.constant 0 : index
    %105 = vector.load %arg8[%c0_42, %c0_43] : memref<32x32xbf16, #tpu.memory_space<vmem>>, vector<32x32xbf16>
    %cst_44 = arith.constant dense<0.000000e+00> : vector<16x32xf32>
    %106 = tpu.matmul %104, %105, %cst_44 {dimension_numbers = #tpu.dot_dimension_numbers<[1], [0], [0], [1], [0, 0, 1, 1], [], []>} : vector<16x32xbf16>, vector<32x32xbf16>, vector<16x32xf32> -> vector<16x32xf32>
    %c9 = arith.constant 9 : index
    %c0_45 = arith.constant 0 : index
    %107 = vector.load %arg3[%c9, %c0_45] : memref<16x32xf32, #tpu.memory_space<vmem>>, vector<1x32xf32>
    %108 = vector.broadcast %107 : vector<1x32xf32> to vector<16x32xf32>
    %109 = arith.addf %106, %108 : vector<16x32xf32>
    %110 = arith.addf %109, %65 : vector<16x32xf32>
    %c10 = arith.constant 10 : index
    %c0_46 = arith.constant 0 : index
    %111 = vector.load %arg3[%c10, %c0_46] : memref<16x32xf32, #tpu.memory_space<vmem>>, vector<1x32xf32>
    %c11 = arith.constant 11 : index
    %c0_47 = arith.constant 0 : index
    %112 = vector.load %arg3[%c11, %c0_47] : memref<16x32xf32, #tpu.memory_space<vmem>>, vector<1x32xf32>
    %cst_48 = arith.constant dense<0.000000e+00> : vector<16xf32>
    %113 = vector.multi_reduction <add>, %110, %cst_48 [1] : vector<16x32xf32> to vector<16xf32>
    %114 = vector.shape_cast %113 : vector<16xf32> to vector<16x1xf32>
    %cst_49 = arith.constant 3.200000e+01 : f32
    %115 = vector.broadcast %cst_49 : f32 to vector<16x1xf32>
    %116 = arith.divf %114, %115 : vector<16x1xf32>
    %117 = vector.broadcast %116 : vector<16x1xf32> to vector<16x32xf32>
    %118 = arith.subf %110, %117 : vector<16x32xf32>
    %119 = arith.mulf %118, %118 : vector<16x32xf32>
    %cst_50 = arith.constant dense<0.000000e+00> : vector<16xf32>
    %120 = vector.multi_reduction <add>, %119, %cst_50 [1] : vector<16x32xf32> to vector<16xf32>
    %121 = vector.shape_cast %120 : vector<16xf32> to vector<16x1xf32>
    %cst_51 = arith.constant 3.200000e+01 : f32
    %122 = vector.broadcast %cst_51 : f32 to vector<16x1xf32>
    %123 = arith.divf %121, %122 : vector<16x1xf32>
    %124 = vector.broadcast %116 : vector<16x1xf32> to vector<16x32xf32>
    %125 = arith.subf %110, %124 : vector<16x32xf32>
    %cst_52 = arith.constant 9.99999974E-6 : f32
    %126 = vector.broadcast %cst_52 : f32 to vector<16x1xf32>
    %127 = arith.addf %123, %126 : vector<16x1xf32>
    %128 = math.rsqrt %127 : vector<16x1xf32>
    %129 = vector.broadcast %128 : vector<16x1xf32> to vector<16x32xf32>
    %130 = arith.mulf %125, %129 : vector<16x32xf32>
    %131 = vector.broadcast %111 : vector<1x32xf32> to vector<16x32xf32>
    %132 = arith.mulf %130, %131 : vector<16x32xf32>
    %133 = vector.broadcast %112 : vector<1x32xf32> to vector<16x32xf32>
    %134 = arith.addf %132, %133 : vector<16x32xf32>
    %c0_53 = arith.constant 0 : index
    %c0_54 = arith.constant 0 : index
    %135 = vector.load %arg9[%c0_53, %c0_54] : memref<16x32xf32, #tpu.memory_space<vmem>>, vector<16x32xf32>
    tpu.vector_store %arg9[%c0_53, %c0_54], %134 {strides = array<i32>} : memref<16x32xf32, #tpu.memory_space<vmem>>, vector<16x32xf32>,
    return
  }
  func.func @transform_0(%arg0: i32) -> (i32, i32) {
    %c0_i32 = arith.constant 0 : i32
    %c0_i32_0 = arith.constant 0 : i32
    return %arg0, %c0_i32 : i32, i32
  }
  func.func @transform_1(%arg0: i32) -> (i32, i32) {
    %c0_i32 = arith.constant 0 : i32
    %c0_i32_0 = arith.constant 0 : i32
    return %arg0, %c0_i32 : i32, i32
  }
  func.func @transform_2(%arg0: i32) -> (i32, i32) {
    %c0_i32 = arith.constant 0 : i32
    %c0_i32_0 = arith.constant 0 : i32
    %c0_i32_1 = arith.constant 0 : i32
    return %c0_i32, %c0_i32_0 : i32, i32
  }
  func.func @transform_3(%arg0: i32) -> (i32, i32) {
    %c0_i32 = arith.constant 0 : i32
    %c0_i32_0 = arith.constant 0 : i32
    %c0_i32_1 = arith.constant 0 : i32
    return %c0_i32, %c0_i32_0 : i32, i32
  }
  func.func @transform_4(%arg0: i32) -> (i32, i32) {
    %c0_i32 = arith.constant 0 : i32
    %c0_i32_0 = arith.constant 0 : i32
    %c0_i32_1 = arith.constant 0 : i32
    return %c0_i32, %c0_i32_0 : i32, i32
  }
  func.func @transform_5(%arg0: i32) -> (i32, i32) {
    %c0_i32 = arith.constant 0 : i32
    %c0_i32_0 = arith.constant 0 : i32
    %c0_i32_1 = arith.constant 0 : i32
    return %c0_i32, %c0_i32_0 : i32, i32
  }
  func.func @transform_6(%arg0: i32) -> (i32, i32) {
    %c0_i32 = arith.constant 0 : i32
    %c0_i32_0 = arith.constant 0 : i32
    %c0_i32_1 = arith.constant 0 : i32
    return %c0_i32, %c0_i32_0 : i32, i32
  }
  func.func @transform_7(%arg0: i32) -> (i32, i32) {
    %c0_i32 = arith.constant 0 : i32
    %c0_i32_0 = arith.constant 0 : i32
    %c0_i32_1 = arith.constant 0 : i32
    return %c0_i32, %c0_i32_0 : i32, i32
  }
  func.func @transform_8(%arg0: i32) -> (i32, i32) {
    %c0_i32 = arith.constant 0 : i32
    %c0_i32_0 = arith.constant 0 : i32
    return %arg0, %c0_i32 : i32, i32
  }
}

</mosaic_0001>

<llo_original>
// kernel: _postfuse_forward.1
$region0: #{_postfuse_forward.1}
  #allocation0 [shape = 'u32[]', space=smem, size = 0x4, offset = 0x4, fixed_abs, tag = 'smem constant byte address 0x4 - core index']
  #allocation1 [shape = 'u32[144,128]{1,0:T(1,128)}', space=vmem, size = 0x12000, scoped, tag = 'internal scratch']
  %s0 = inlined_call_operand.vmem [shape: f32[16,32], index: 0, kind: input, shape index: {}]
  %s1 = inlined_call_operand.vmem [shape: f32[16,32], index: 1, kind: input, shape index: {}]
  %s2 = inlined_call_operand.vmem [shape: f32[16,32], index: 2, kind: input, shape index: {}]
  %s3 = inlined_call_operand.vmem [shape: bf16[32,32], index: 3, kind: input, shape index: {}]
  %s4 = inlined_call_operand.vmem [shape: bf16[32,32], index: 4, kind: input, shape index: {}]
  %s5 = inlined_call_operand.vmem [shape: bf16[32,32], index: 5, kind: input, shape index: {}]
  %s6 = inlined_call_operand.vmem [shape: bf16[32,32], index: 6, kind: input, shape index: {}]
  %s7 = inlined_call_operand.vmem [shape: bf16[32,32], index: 7, kind: input, shape index: {}]
  %s8 = inlined_call_operand.vmem [shape: f32[16,32], index: 8, kind: output, shape index: {}]
  %s9 = sld [smem:[#allocation0]]
  $region42: #{_postfuse_forward.1} parent=0
    _
  %s11 = ssub.s32 1, %s9
  %s12 = scalar_select 0, %s11, %s9
  // Predicated region
  $region2: #{_postfuse_forward.1} parent=0 // pred_check
    _
  $region3: #{_postfuse_forward.1} parent=0 // pred_check_branch
    %14 = sbr.rel (0) target = $region5
  $region4: #{_postfuse_forward.1} parent=0 // pred_region
    _
  $region5: #{_postfuse_forward.1} parent=0 // pred_fallthru
    _
  // Predicated region
  $region6: #{_postfuse_forward.1} parent=0 // pred_check
    _
  $region7: #{_postfuse_forward.1} parent=0 // pred_check_branch
    %16 = sbr.rel (0) target = $region9
  $region8: #{_postfuse_forward.1} parent=0 // pred_region
    _
  $region9: #{_postfuse_forward.1} parent=0 // pred_fallthru
    _
  // Predicated region
  $region10: #{_postfuse_forward.1} parent=0 // pred_check
    _
  $region11: #{_postfuse_forward.1} parent=0 // pred_check_branch
    %18 = sbr.rel (0) target = $region13
  $region12: #{_postfuse_forward.1} parent=0 // pred_region
    _
  $region13: #{_postfuse_forward.1} parent=0 // pred_fallthru
    _
  // Predicated region
  $region14: #{_postfuse_forward.1} parent=0 // pred_check
    _
  $region15: #{_postfuse_forward.1} parent=0 // pred_check_branch
    %20 = sbr.rel (0) target = $region17
  $region16: #{_postfuse_forward.1} parent=0 // pred_region
    _
  $region17: #{_postfuse_forward.1} parent=0 // pred_fallthru
    _
  // Predicated region
  $region18: #{_postfuse_forward.1} parent=0 // pred_check
    _
  $region19: #{_postfuse_forward.1} parent=0 // pred_check_branch
    %22 = sbr.rel (0) target = $region21
  $region20: #{_postfuse_forward.1} parent=0 // pred_region
    _
  $region21: #{_postfuse_forward.1} parent=0 // pred_fallthru
    _
  // Predicated region
  $region22: #{_postfuse_forward.1} parent=0 // pred_check
    _
  $region23: #{_postfuse_forward.1} parent=0 // pred_check_branch
    %24 = sbr.rel (0) target = $region25
  $region24: #{_postfuse_forward.1} parent=0 // pred_region
    _
  $region25: #{_postfuse_forward.1} parent=0 // pred_fallthru
    _
  // Predicated region
  $region26: #{_postfuse_forward.1} parent=0 // pred_check
    _
  $region27: #{_postfuse_forward.1} parent=0 // pred_check_branch
    %26 = sbr.rel (0) target = $region29
  $region28: #{_postfuse_forward.1} parent=0 // pred_region
    _
  $region29: #{_postfuse_forward.1} parent=0 // pred_fallthru
    _
  // Predicated region
  $region30: #{_postfuse_forward.1} parent=0 // pred_check
    _
  $region31: #{_postfuse_forward.1} parent=0 // pred_check_branch
    %28 = sbr.rel (0) target = $region33
  $region32: #{_postfuse_forward.1} parent=0 // pred_region
    _
  $region33: #{_postfuse_forward.1} parent=0 // pred_fallthru
    _
  %v30 = vld [vmem:[%s0] sm:$0xff]
  %v31 = vld [vmem:[%s0 + $0x8] sm:$0xff]
  %v32 = vld [vmem:[%s1] sm:$0xff]
  %v33 = vld [vmem:[%s1 + $0x8] sm:$0xff]
  %vm34 = vcmask 261120
  %v35 = vsel %vm34, %v30, 0.0
  %36 = vadd.xlane.f32.xlu0 %v35
  %v37 = vpop.xlane.xlu0 %36
  %v38 = vsel %vm34, %v31, 0.0
  %39 = vadd.xlane.f32.xlu0 %v38
  %v40 = vpop.xlane.xlu0 %39
  %v41 = vsel %vm34, %v32, 0.0
  %42 = vadd.xlane.f32.xlu0 %v41
  %v43 = vpop.xlane.xlu0 %42
  %v44 = vsel %vm34, %v33, 0.0
  %45 = vadd.xlane.f32.xlu0 %v44
  %v46 = vpop.xlane.xlu0 %45
  %v47 = vadd.f32 %v37, %v43
  %v48 = vadd.f32 %v40, %v46
  %v49 = vmul.f32 %v47, 0.015625
  %v50 = vmul.f32 %v48, 0.015625
  %v51 = vsub.f32 %v30, %v49
  %v52 = vsub.f32 %v31, %v50
  %v53 = vsub.f32 %v32, %v49
  %v54 = vsub.f32 %v33, %v50
  %v55 = vmul.f32 %v51, %v51
  %v56 = vmul.f32 %v52, %v52
  %v57 = vsel %vm34, %v55, 0.0
  %58 = vadd.xlane.f32.xlu0 %v57
  %v59 = vpop.xlane.xlu0 %58
  %v60 = vsel %vm34, %v56, 0.0
  %61 = vadd.xlane.f32.xlu0 %v60
  %v62 = vpop.xlane.xlu0 %61
  %v63 = vmul.f32 %v53, %v53
  %v64 = vmul.f32 %v54, %v54
  %v65 = vsel %vm34, %v63, 0.0
  %66 = vadd.xlane.f32.xlu0 %v65
  %v67 = vpop.xlane.xlu0 %66
  %v68 = vsel %vm34, %v64, 0.0
  %69 = vadd.xlane.f32.xlu0 %v68
  %v70 = vpop.xlane.xlu0 %69
  %v71 = vadd.f32 %v59, %v67
  %v72 = vadd.f32 %v62, %v70
  %v73 = vmul.f32 %v71, 0.015625
  %v74 = vmul.f32 %v72, 0.015625
  %v75 = vadd.f32 %v73, 1e-05
  %v76 = vadd.f32 %v74, 1e-05
  %v77 = vrsqrt.pop %v75
  %v78 = vrsqrt.pop %v76
  %v79 = vmul.f32 %v51, %v77
  %v80 = vmul.f32 %v52, %v78
  %v81 = vld [vmem:[%s2] sm:$0x1]
  %v82 = vlaneseq
  %v83 = vshrl.u32 %v82, 7
  %v84 = vsub.s32 0, %v83
  %v85 = vrot.slane %v81, %v84
  %v86 = vmul.f32 %v79, %v85
  %v87 = vmul.f32 %v80, %v85
  %v88 = vld [vmem:[%s2 + $0x1] sm:$0x1]
  %v89 = vlaneseq
  %v90 = vshrl.u32 %v89, 7
  %v91 = vsub.s32 0, %v90
  %v92 = vrot.slane %v88, %v91
  %v93 = vadd.f32 %v86, %v92
  %v94 = vadd.f32 %v87, %v92
  %v95 = vmul.f32 %v53, %v77
  %v96 = vmul.f32 %v54, %v78
  %v97 = vld [vmem:[%s2 + $0x2] sm:$0x1]
  %v98 = vlaneseq
  %v99 = vshrl.u32 %v98, 7
  %v100 = vsub.s32 0, %v99
  %v101 = vrot.slane %v97, %v100
  %v102 = vmul.f32 %v95, %v101
  %v103 = vmul.f32 %v96, %v101
  %v104 = vld [vmem:[%s2 + $0x3] sm:$0x1]
  %v105 = vlaneseq
  %v106 = vshrl.u32 %v105, 7
  %v107 = vsub.s32 0, %v106
  %v108 = vrot.slane %v104, %v107
  %v109 = vadd.f32 %v102, %v108
  %v110 = vadd.f32 %v103, %v108
  %v111 = vpack.c.bf16 %v94, %v93
  %v112 = vld [vmem:[%s3] sm:$0xf]
  %v113 = vld [vmem:[%s3 + $0x4] sm:$0xf]
  %v114 = vld [vmem:[%s3 + $0x8] sm:$0xf]
  %v115 = vld [vmem:[%s3 + $0xc] sm:$0xf]
  %v116 = vpack.c.bf16 %v110, %v109
  %v117 = vld [vmem:[%s4] sm:$0xf]
  %v118 = vld [vmem:[%s4 + $0x4] sm:$0xf]
  %v119 = vld [vmem:[%s4 + $0x8] sm:$0xf]
  %v120 = vld [vmem:[%s4 + $0xc] sm:$0xf]
  %v125 = vunpack.c.l.b16 %v117
  %v126 = vunpack.c.l.b16 %v118
  %v127 = vunpack.c.l.b16 %v119
  %v128 = vunpack.c.l.b16 %v120
  %v129 = vpack.c.b16 %v126, %v125
  %v130 = vpack.c.b16 %v128, %v127
  %v134 = vsel %vm34, %v116, 0
  %136 = vmatprep.subr.bf16.mxu0 0
  %137 = vmatpush1.bf16.msra.mxu0 %v129
  %138 = vmatprep.subr.bf16.mxu0 0
  %139 = vmatpush1.bf16.msra.mxu0 %v130
  %140 = vmatprep.subr.bf16.mxu0 0
  %141 = vmatpush1.bf16.msra.mxu0 0
  %142 = vmatprep.subr.bf16.mxu0 0
  %143 = vmatpush1.bf16.msra.mxu0 0
  %144 = vmatprep.subr.bf16.mxu0 0
  %145 = vmatpush1.bf16.msra.mxu0 0
  %146 = vmatprep.subr.bf16.mxu0 0
  %147 = vmatpush1.bf16.msra.mxu0 0
  %148 = vmatprep.subr.bf16.mxu0 0
  %149 = vmatpush1.bf16.msra.mxu0 0
  %150 = vmatprep.subr.bf16.mxu0 0
  %151 = vmatpush1.bf16.msra.mxu0 0
  %152 = vmatprep.subr.bf16.mxu0 0
  %153 = vmatpush1.bf16.msra.mxu0 0
  %154 = vmatprep.subr.bf16.mxu0 0
  %155 = vmatpush1.bf16.msra.mxu0 0
  %156 = vmatprep.subr.bf16.mxu0 0
  %157 = vmatpush1.bf16.msra.mxu0 0
  %158 = vmatprep.subr.bf16.mxu0 0
  %159 = vmatpush1.bf16.msra.mxu0 0
  %160 = vmatprep.subr.bf16.mxu0 0
  %161 = vmatpush1.bf16.msra.mxu0 0
  %162 = vmatprep.subr.bf16.mxu0 0
  %163 = vmatpush1.bf16.msra.mxu0 0
  %164 = vmatprep.subr.bf16.mxu0 0
  %165 = vmatpush1.bf16.msra.mxu0 0
  %166 = vmatprep.subr.bf16.mxu0 0
  %167 = vmatpush1.bf16.msra.mxu0 0
  %168 = vmatprep.mubr.bf16.mxu0 0
  %169 = vmatmul.mubr.bf16.gmra.mrb[0].mxu0 %v134
  %v170 = vpop.f32.mrb[0].mxu0
  %v171 = vadd.f32 0.0, %v170
  %v172 = vpop.f32.mrb[0].mxu0
  %v173 = vpop.f32.mrb[0].mxu0
  %v174 = vadd.f32 0.0, %v173
  %v175 = vpop.f32.mrb[0].mxu0
  %176 = vdwg.mxu0
  %v181 = vunpack.c.l.b16 %v112
  %v182 = vunpack.c.l.b16 %v113
  %v183 = vunpack.c.l.b16 %v114
  %v184 = vunpack.c.l.b16 %v115
  %v185 = vpack.c.b16 %v182, %v181
  %v186 = vpack.c.b16 %v184, %v183
  %v190 = vsel %vm34, %v111, 0
  %192 = vmatprep.subr.bf16.mxu0 0
  %193 = vmatpush1.bf16.msra.mxu0 %v185
  %194 = vmatprep.subr.bf16.mxu0 0
  %195 = vmatpush1.bf16.msra.mxu0 %v186
  %196 = vmatprep.subr.bf16.mxu0 0
  %197 = vmatpush1.bf16.msra.mxu0 0
  %198 = vmatprep.subr.bf16.mxu0 0
  %199 = vmatpush1.bf16.msra.mxu0 0
  %200 = vmatprep.subr.bf16.mxu0 0
  %201 = vmatpush1.bf16.msra.mxu0 0
  %202 = vmatprep.subr.bf16.mxu0 0
  %203 = vmatpush1.bf16.msra.mxu0 0
  %204 = vmatprep.subr.bf16.mxu0 0
  %205 = vmatpush1.bf16.msra.mxu0 0
  %206 = vmatprep.subr.bf16.mxu0 0
  %207 = vmatpush1.bf16.msra.mxu0 0
  %208 = vmatprep.subr.bf16.mxu0 0
  %209 = vmatpush1.bf16.msra.mxu0 0
  %210 = vmatprep.subr.bf16.mxu0 0
  %211 = vmatpush1.bf16.msra.mxu0 0
  %212 = vmatprep.subr.bf16.mxu0 0
  %213 = vmatpush1.bf16.msra.mxu0 0
  %214 = vmatprep.subr.bf16.mxu0 0
  %215 = vmatpush1.bf16.msra.mxu0 0
  %216 = vmatprep.subr.bf16.mxu0 0
  %217 = vmatpush1.bf16.msra.mxu0 0
  %218 = vmatprep.subr.bf16.mxu0 0
  %219 = vmatpush1.bf16.msra.mxu0 0
  %220 = vmatprep.subr.bf16.mxu0 0
  %221 = vmatpush1.bf16.msra.mxu0 0
  %222 = vmatprep.subr.bf16.mxu0 0
  %223 = vmatpush1.bf16.msra.mxu0 0
  %224 = vmatprep.mubr.bf16.mxu0 0
  %225 = vmatmul.mubr.bf16.gmra.mrb[0].mxu0 %v190
  %v226 = vpop.f32.mrb[0].mxu0
  %v227 = vadd.f32 %v171, %v226
  %v228 = vpop.f32.mrb[0].mxu0
  %v229 = vpop.f32.mrb[0].mxu0
  %v230 = vadd.f32 %v174, %v229
  %v231 = vpop.f32.mrb[0].mxu0
  %232 = vdwg.mxu0
  %v233 = vld [vmem:[%s2 + $0x4] sm:$0x1]
  %v234 = vlaneseq
  %v235 = vshrl.u32 %v234, 7
  %v236 = vsub.s32 0, %v235
  %v237 = vrot.slane %v233, %v236
  %v238 = vadd.f32 %v227, %v237
  %v239 = vadd.f32 %v230, %v237
  %v240 = vmul.f32 %v238, 0.5
  %v241 = vmul.f32 %v239, 0.5
  %v242 = vmul.f32 %v238, 0.70710677
  %v243 = vmul.f32 %v239, 0.70710677
  %v244 = verf.f32.pop %v242
  %v245 = verf.f32.pop %v243
  %v246 = vadd.f32 %v244, 1.0
  %v247 = vadd.f32 %v245, 1.0
  %v248 = vmul.f32 %v240, %v246
  %v249 = vmul.f32 %v241, %v247
  %v250 = vpack.c.bf16 %v249, %v248
  %v251 = vld [vmem:[%s5] sm:$0xf]
  %v252 = vld [vmem:[%s5 + $0x4] sm:$0xf]
  %v253 = vld [vmem:[%s5 + $0x8] sm:$0xf]
  %v254 = vld [vmem:[%s5 + $0xc] sm:$0xf]
  %v255 = vld [vmem:[%s2 + $0x5] sm:$0x1]
  %v256 = vlaneseq
  %v257 = vshrl.u32 %v256, 7
  %v258 = vsub.s32 0, %v257
  %v259 = vrot.slane %v255, %v258
  %v264 = vunpack.c.l.b16 %v251
  %v265 = vunpack.c.l.b16 %v252
  %v266 = vunpack.c.l.b16 %v253
  %v267 = vunpack.c.l.b16 %v254
  %v268 = vpack.c.b16 %v265, %v264
  %v269 = vpack.c.b16 %v267, %v266
  %v273 = vsel %vm34, %v250, 0
  %275 = vmatprep.subr.bf16.mxu0 0
  %276 = vmatpush1.bf16.msra.mxu0 %v268
  %277 = vmatprep.subr.bf16.mxu0 0
  %278 = vmatpush1.bf16.msra.mxu0 %v269
  %279 = vmatprep.subr.bf16.mxu0 0
  %280 = vmatpush1.bf16.msra.mxu0 0
  %281 = vmatprep.subr.bf16.mxu0 0
  %282 = vmatpush1.bf16.msra.mxu0 0
  %283 = vmatprep.subr.bf16.mxu0 0
  %284 = vmatpush1.bf16.msra.mxu0 0
  %285 = vmatprep.subr.bf16.mxu0 0
  %286 = vmatpush1.bf16.msra.mxu0 0
  %287 = vmatprep.subr.bf16.mxu0 0
  %288 = vmatpush1.bf16.msra.mxu0 0
  %289 = vmatprep.subr.bf16.mxu0 0
  %290 = vmatpush1.bf16.msra.mxu0 0
  %291 = vmatprep.subr.bf16.mxu0 0
  %292 = vmatpush1.bf16.msra.mxu0 0
  %293 = vmatprep.subr.bf16.mxu0 0
  %294 = vmatpush1.bf16.msra.mxu0 0
  %295 = vmatprep.subr.bf16.mxu0 0
  %296 = vmatpush1.bf16.msra.mxu0 0
  %297 = vmatprep.subr.bf16.mxu0 0
  %298 = vmatpush1.bf16.msra.mxu0 0
  %299 = vmatprep.subr.bf16.mxu0 0
  %300 = vmatpush1.bf16.msra.mxu0 0
  %301 = vmatprep.subr.bf16.mxu0 0
  %302 = vmatpush1.bf16.msra.mxu0 0
  %303 = vmatprep.subr.bf16.mxu0 0
  %304 = vmatpush1.bf16.msra.mxu0 0
  %305 = vmatprep.subr.bf16.mxu0 0
  %306 = vmatpush1.bf16.msra.mxu0 0
  %307 = vmatprep.mubr.bf16.mxu0 0
  %308 = vmatmul.mubr.bf16.gmra.mrb[0].mxu0 %v273
  %v309 = vpop.f32.mrb[0].mxu0
  %v310 = vadd.f32 %v259, %v309
  %v311 = vpop.f32.mrb[0].mxu0
  %v312 = vpop.f32.mrb[0].mxu0
  %v313 = vadd.f32 %v259, %v312
  %v314 = vpop.f32.mrb[0].mxu0
  %315 = vdwg.mxu0
  %v316 = vadd.f32 %v310, %v30
  %v317 = vadd.f32 %v313, %v31
  %v318 = vld [vmem:[%s2 + $0x6] sm:$0x1]
  %v319 = vld [vmem:[%s2 + $0x7] sm:$0x1]
  %v320 = vsel %vm34, %v316, 0.0
  %321 = vadd.xlane.f32.xlu0 %v320
  %v322 = vpop.xlane.xlu0 %321
  %v323 = vsel %vm34, %v317, 0.0
  %324 = vadd.xlane.f32.xlu0 %v323
  %v325 = vpop.xlane.xlu0 %324
  %v326 = vrcp.pop 32.0
  %v327 = vmul.f32 %v322, %v326
  %v328 = vmul.f32 %v325, %v326
  %v329 = vsub.f32 %v316, %v327
  %v330 = vsub.f32 %v317, %v328
  %v331 = vmul.f32 %v329, %v329
  %v332 = vmul.f32 %v330, %v330
  %v333 = vsel %vm34, %v331, 0.0
  %334 = vadd.xlane.f32.xlu0 %v333
  %v335 = vpop.xlane.xlu0 %334
  %v336 = vsel %vm34, %v332, 0.0
  %337 = vadd.xlane.f32.xlu0 %v336
  %v338 = vpop.xlane.xlu0 %337
  %v339 = vmul.f32 %v335, %v326
  %v340 = vmul.f32 %v338, %v326
  %v341 = vadd.f32 %v339, 1e-05
  %v342 = vadd.f32 %v340, 1e-05
  %v343 = vrsqrt.pop %v341
  %v344 = vrsqrt.pop %v342
  %v345 = vmul.f32 %v329, %v343
  %v346 = vmul.f32 %v330, %v344
  %v347 = vlaneseq
  %v348 = vshrl.u32 %v347, 7
  %v349 = vsub.s32 0, %v348
  %v350 = vrot.slane %v318, %v349
  %v351 = vmul.f32 %v345, %v350
  %v352 = vmul.f32 %v346, %v350
  %v353 = vlaneseq
  %v354 = vshrl.u32 %v353, 7
  %v355 = vsub.s32 0, %v354
  %v356 = vrot.slane %v319, %v355
  %v357 = vadd.f32 %v351, %v356
  %v358 = vadd.f32 %v352, %v356
  %v359 = vpack.c.bf16 %v358, %v357
  %v360 = vld [vmem:[%s6] sm:$0xf]
  %v361 = vld [vmem:[%s6 + $0x4] sm:$0xf]
  %v362 = vld [vmem:[%s6 + $0x8] sm:$0xf]
  %v363 = vld [vmem:[%s6 + $0xc] sm:$0xf]
  %v364 = vld [vmem:[%s2 + $0x8] sm:$0x1]
  %v365 = vlaneseq
  %v366 = vshrl.u32 %v365, 7
  %v367 = vsub.s32 0, %v366
  %v368 = vrot.slane %v364, %v367
  %v373 = vunpack.c.l.b16 %v360
  %v374 = vunpack.c.l.b16 %v361
  %v375 = vunpack.c.l.b16 %v362
  %v376 = vunpack.c.l.b16 %v363
  %v377 = vpack.c.b16 %v374, %v373
  %v378 = vpack.c.b16 %v376, %v375
  %v382 = vsel %vm34, %v359, 0
  %384 = vmatprep.subr.bf16.mxu0 0
  %385 = vmatpush1.bf16.msra.mxu0 %v377
  %386 = vmatprep.subr.bf16.mxu0 0
  %387 = vmatpush1.bf16.msra.mxu0 %v378
  %388 = vmatprep.subr.bf16.mxu0 0
  %389 = vmatpush1.bf16.msra.mxu0 0
  %390 = vmatprep.subr.bf16.mxu0 0
  %391 = vmatpush1.bf16.msra.mxu0 0
  %392 = vmatprep.subr.bf16.mxu0 0
  %393 = vmatpush1.bf16.msra.mxu0 0
  %394 = vmatprep.subr.bf16.mxu0 0
  %395 = vmatpush1.bf16.msra.mxu0 0
  %396 = vmatprep.subr.bf16.mxu0 0
  %397 = vmatpush1.bf16.msra.mxu0 0
  %398 = vmatprep.subr.bf16.mxu0 0
  %399 = vmatpush1.bf16.msra.mxu0 0
  %400 = vmatprep.subr.bf16.mxu0 0
  %401 = vmatpush1.bf16.msra.mxu0 0
  %402 = vmatprep.subr.bf16.mxu0 0
  %403 = vmatpush1.bf16.msra.mxu0 0
  %404 = vmatprep.subr.bf16.mxu0 0
  %405 = vmatpush1.bf16.msra.mxu0 0
  %406 = vmatprep.subr.bf16.mxu0 0
  %407 = vmatpush1.bf16.msra.mxu0 0
  %408 = vmatprep.subr.bf16.mxu0 0
  %409 = vmatpush1.bf16.msra.mxu0 0
  %410 = vmatprep.subr.bf16.mxu0 0
  %411 = vmatpush1.bf16.msra.mxu0 0
  %412 = vmatprep.subr.bf16.mxu0 0
  %413 = vmatpush1.bf16.msra.mxu0 0
  %414 = vmatprep.subr.bf16.mxu0 0
  %415 = vmatpush1.bf16.msra.mxu0 0
  %416 = vmatprep.mubr.bf16.mxu0 0
  %417 = vmatmul.mubr.bf16.gmra.mrb[0].mxu0 %v382
  %v418 = vpop.f32.mrb[0].mxu0
  %v419 = vadd.f32 %v368, %v418
  %v420 = vpop.f32.mrb[0].mxu0
  %v421 = vpop.f32.mrb[0].mxu0
  %v422 = vadd.f32 %v368, %v421
  %v423 = vpop.f32.mrb[0].mxu0
  %424 = vdwg.mxu0
  %v425 = vmul.f32 %v419, 0.5
  %v426 = vmul.f32 %v422, 0.5
  %v427 = vmul.f32 %v419, 0.70710677
  %v428 = vmul.f32 %v422, 0.70710677
  %v429 = verf.f32.pop %v427
  %v430 = verf.f32.pop %v428
  %v431 = vadd.f32 %v429, 1.0
  %v432 = vadd.f32 %v430, 1.0
  %v433 = vmul.f32 %v425, %v431
  %v434 = vmul.f32 %v426, %v432
  %v435 = vpack.c.bf16 %v434, %v433
  %v436 = vld [vmem:[%s7] sm:$0xf]
  %v437 = vld [vmem:[%s7 + $0x4] sm:$0xf]
  %v438 = vld [vmem:[%s7 + $0x8] sm:$0xf]
  %v439 = vld [vmem:[%s7 + $0xc] sm:$0xf]
  %v440 = vld [vmem:[%s2 + $0x9] sm:$0x1]
  %v441 = vlaneseq
  %v442 = vshrl.u32 %v441, 7
  %v443 = vsub.s32 0, %v442
  %v444 = vrot.slane %v440, %v443
  %v449 = vunpack.c.l.b16 %v436
  %v450 = vunpack.c.l.b16 %v437
  %v451 = vunpack.c.l.b16 %v438
  %v452 = vunpack.c.l.b16 %v439
  %v453 = vpack.c.b16 %v450, %v449
  %v454 = vpack.c.b16 %v452, %v451
  %v458 = vsel %vm34, %v435, 0
  %460 = vmatprep.subr.bf16.mxu0 0
  %461 = vmatpush1.bf16.msra.mxu0 %v453
  %462 = vmatprep.subr.bf16.mxu0 0
  %463 = vmatpush1.bf16.msra.mxu0 %v454
  %464 = vmatprep.subr.bf16.mxu0 0
  %465 = vmatpush1.bf16.msra.mxu0 0
  %466 = vmatprep.subr.bf16.mxu0 0
  %467 = vmatpush1.bf16.msra.mxu0 0
  %468 = vmatprep.subr.bf16.mxu0 0
  %469 = vmatpush1.bf16.msra.mxu0 0
  %470 = vmatprep.subr.bf16.mxu0 0
  %471 = vmatpush1.bf16.msra.mxu0 0
  %472 = vmatprep.subr.bf16.mxu0 0
  %473 = vmatpush1.bf16.msra.mxu0 0
  %474 = vmatprep.subr.bf16.mxu0 0
  %475 = vmatpush1.bf16.msra.mxu0 0
  %476 = vmatprep.subr.bf16.mxu0 0
  %477 = vmatpush1.bf16.msra.mxu0 0
  %478 = vmatprep.subr.bf16.mxu0 0
  %479 = vmatpush1.bf16.msra.mxu0 0
  %480 = vmatprep.subr.bf16.mxu0 0
  %481 = vmatpush1.bf16.msra.mxu0 0
  %482 = vmatprep.subr.bf16.mxu0 0
  %483 = vmatpush1.bf16.msra.mxu0 0
  %484 = vmatprep.subr.bf16.mxu0 0
  %485 = vmatpush1.bf16.msra.mxu0 0
  %486 = vmatprep.subr.bf16.mxu0 0
  %487 = vmatpush1.bf16.msra.mxu0 0
  %488 = vmatprep.subr.bf16.mxu0 0
  %489 = vmatpush1.bf16.msra.mxu0 0
  %490 = vmatprep.subr.bf16.mxu0 0
  %491 = vmatpush1.bf16.msra.mxu0 0
  %492 = vmatprep.mubr.bf16.mxu0 0
  %493 = vmatmul.mubr.bf16.gmra.mrb[0].mxu0 %v458
  %v494 = vpop.f32.mrb[0].mxu0
  %v495 = vadd.f32 %v444, %v494
  %v496 = vpop.f32.mrb[0].mxu0
  %v497 = vpop.f32.mrb[0].mxu0
  %v498 = vadd.f32 %v444, %v497
  %v499 = vpop.f32.mrb[0].mxu0
  %500 = vdwg.mxu0
  %v501 = vadd.f32 %v495, %v316
  %v502 = vadd.f32 %v498, %v317
  %v503 = vld [vmem:[%s2 + $0xa] sm:$0x1]
  %v504 = vld [vmem:[%s2 + $0xb] sm:$0x1]
  %v505 = vsel %vm34, %v501, 0.0
  %506 = vadd.xlane.f32.xlu0 %v505
  %v507 = vpop.xlane.xlu0 %506
  %v508 = vsel %vm34, %v502, 0.0
  %509 = vadd.xlane.f32.xlu0 %v508
  %v510 = vpop.xlane.xlu0 %509
  %v511 = vmul.f32 %v507, %v326
  %v512 = vmul.f32 %v510, %v326
  %v513 = vsub.f32 %v501, %v511
  %v514 = vsub.f32 %v502, %v512
  %v515 = vmul.f32 %v513, %v513
  %v516 = vmul.f32 %v514, %v514
  %v517 = vsel %vm34, %v515, 0.0
  %518 = vadd.xlane.f32.xlu0 %v517
  %v519 = vpop.xlane.xlu0 %518
  %v520 = vsel %vm34, %v516, 0.0
  %521 = vadd.xlane.f32.xlu0 %v520
  %v522 = vpop.xlane.xlu0 %521
  %v523 = vmul.f32 %v519, %v326
  %v524 = vmul.f32 %v522, %v326
  %v525 = vadd.f32 %v523, 1e-05
  %v526 = vadd.f32 %v524, 1e-05
  %v527 = vrsqrt.pop %v525
  %v528 = vrsqrt.pop %v526
  %v529 = vmul.f32 %v513, %v527
  %v530 = vmul.f32 %v514, %v528
  %v531 = vlaneseq
  %v532 = vshrl.u32 %v531, 7
  %v533 = vsub.s32 0, %v532
  %v534 = vrot.slane %v503, %v533
  %v535 = vmul.f32 %v529, %v534
  %v536 = vmul.f32 %v530, %v534
  %v537 = vlaneseq
  %v538 = vshrl.u32 %v537, 7
  %v539 = vsub.s32 0, %v538
  %v540 = vrot.slane %v504, %v539
  %v541 = vadd.f32 %v535, %v540
  %v542 = vadd.f32 %v536, %v540
  %543 = vst.msk [vmem:[%s8] sm:$0xff] %vm34, %v541
  %544 = vst.msk [vmem:[%s8 + $0x8] sm:$0xff] %vm34, %v542
  // Predicated region
  $region34: #{_postfuse_forward.1} parent=0 // pred_check
    _
  $region35: #{_postfuse_forward.1} parent=0 // pred_check_branch
    %546 = sbr.rel (0) target = $region37
  $region36: #{_postfuse_forward.1} parent=0 // pred_region
    _
  $region37: #{_postfuse_forward.1} parent=0 // pred_fallthru
    _
  // Predicated region
  $region38: #{_postfuse_forward.1} parent=0 // pred_check
    _
  $region39: #{_postfuse_forward.1} parent=0 // pred_check_branch
    %548 = sbr.rel (0) target = $region41
  $region40: #{_postfuse_forward.1} parent=0 // pred_region
    _
  $region41: #{_postfuse_forward.1} parent=0 // pred_fallthru
    _

// kernel: _postfuse_forward.1
$region0: #{_postfuse_forward.1}
  #allocation0 [shape = 'u32[]', space=smem, size = 0x4, offset = 0x4, fixed_abs, tag = 'smem constant byte address 0x4 - core index']
  #allocation1 [shape = 'u32[144,128]{1,0:T(1,128)}', space=vmem, size = 0x12000, scoped, tag = 'internal scratch']
  %s0 = inlined_call_operand.vmem [shape: f32[16,32], index: 0, kind: input, shape index: {}]
  %s1 = inlined_call_operand.vmem [shape: f32[16,32], index: 1, kind: input, shape index: {}]
  %s2 = inlined_call_operand.vmem [shape: f32[16,32], index: 2, kind: input, shape index: {}]
  %s3 = inlined_call_operand.vmem [shape: bf16[32,32], index: 3, kind: input, shape index: {}]
  %s4 = inlined_call_operand.vmem [shape: bf16[32,32], index: 4, kind: input, shape index: {}]
  %s5 = inlined_call_operand.vmem [shape: bf16[32,32], index: 5, kind: input, shape index: {}]
  %s6 = inlined_call_operand.vmem [shape: bf16[32,32], index: 6, kind: input, shape index: {}]
  %s7 = inlined_call_operand.vmem [shape: bf16[32,32], index: 7, kind: input, shape index: {}]
  %s8 = inlined_call_operand.vmem [shape: f32[16,32], index: 8, kind: output, shape index: {}]
  %s9 = sld [smem:[#allocation0]]
  $region42: #{_postfuse_forward.1} parent=0
    _
  %s11 = ssub.s32 1, %s9
  %s12 = scalar_select 0, %s11, %s9
  // Predicated region
  $region2: #{_postfuse_forward.1} parent=0 // pred_check
    _
  $region3: #{_postfuse_forward.1} parent=0 // pred_check_branch
    %14 = sbr.rel (0) target = $region5
  $region4: #{_postfuse_forward.1} parent=0 // pred_region
    _
  $region5: #{_postfuse_forward.1} parent=0 // pred_fallthru
    _
  // Predicated region
  $region6: #{_postfuse_forward.1} parent=0 // pred_check
    _
  $region7: #{_postfuse_forward.1} parent=0 // pred_check_branch
    %16 = sbr.rel (0) target = $region9
  $region8: #{_postfuse_forward.1} parent=0 // pred_region
    _
  $region9: #{_postfuse_forward.1} parent=0 // pred_fallthru
    _
  // Predicated region
  $region10: #{_postfuse_forward.1} parent=0 // pred_check
    _
  $region11: #{_postfuse_forward.1} parent=0 // pred_check_branch
    %18 = sbr.rel (0) target = $region13
  $region12: #{_postfuse_forward.1} parent=0 // pred_region
    _
  $region13: #{_postfuse_forward.1} parent=0 // pred_fallthru
    _
  // Predicated region
  $region14: #{_postfuse_forward.1} parent=0 // pred_check
    _
  $region15: #{_postfuse_forward.1} parent=0 // pred_check_branch
    %20 = sbr.rel (0) target = $region17
  $region16: #{_postfuse_forward.1} parent=0 // pred_region
    _
  $region17: #{_postfuse_forward.1} parent=0 // pred_fallthru
    _
  // Predicated region
  $region18: #{_postfuse_forward.1} parent=0 // pred_check
    _
  $region19: #{_postfuse_forward.1} parent=0 // pred_check_branch
    %22 = sbr.rel (0) target = $region21
  $region20: #{_postfuse_forward.1} parent=0 // pred_region
    _
  $region21: #{_postfuse_forward.1} parent=0 // pred_fallthru
    _
  // Predicated region
  $region22: #{_postfuse_forward.1} parent=0 // pred_check
    _
  $region23: #{_postfuse_forward.1} parent=0 // pred_check_branch
    %24 = sbr.rel (0) target = $region25
  $region24: #{_postfuse_forward.1} parent=0 // pred_region
    _
  $region25: #{_postfuse_forward.1} parent=0 // pred_fallthru
    _
  // Predicated region
  $region26: #{_postfuse_forward.1} parent=0 // pred_check
    _
  $region27: #{_postfuse_forward.1} parent=0 // pred_check_branch
    %26 = sbr.rel (0) target = $region29
  $region28: #{_postfuse_forward.1} parent=0 // pred_region
    _
  $region29: #{_postfuse_forward.1} parent=0 // pred_fallthru
    _
  // Predicated region
  $region30: #{_postfuse_forward.1} parent=0 // pred_check
    _
  $region31: #{_postfuse_forward.1} parent=0 // pred_check_branch
    %28 = sbr.rel (0) target = $region33
  $region32: #{_postfuse_forward.1} parent=0 // pred_region
    _
  $region33: #{_postfuse_forward.1} parent=0 // pred_fallthru
    _
  %v30 = vld [vmem:[%s0] sm:$0xff]
  %v31 = vld [vmem:[%s0 + $0x8] sm:$0xff]
  %v32 = vld [vmem:[%s1] sm:$0xff]
  %v33 = vld [vmem:[%s1 + $0x8] sm:$0xff]
  %vm34 = vcmask 261120
  %v35 = vsel %vm34, %v30, 0.0
  %36 = vadd.xlane.f32.xlu0 %v35
  %v37 = vpop.xlane.xlu0 %36
  %v38 = vsel %vm34, %v31, 0.0
  %39 = vadd.xlane.f32.xlu0 %v38
  %v40 = vpop.xlane.xlu0 %39
  %v41 = vsel %vm34, %v32, 0.0
  %42 = vadd.xlane.f32.xlu0 %v41
  %v43 = vpop.xlane.xlu0 %42
  %v44 = vsel %vm34, %v33, 0.0
  %45 = vadd.xlane.f32.xlu0 %v44
  %v46 = vpop.xlane.xlu0 %45
  %v47 = vadd.f32 %v37, %v43
  %v48 = vadd.f32 %v40, %v46
  %v49 = vmul.f32 %v47, 0.015625
  %v50 = vmul.f32 %v48, 0.015625
  %v51 = vsub.f32 %v30, %v49
  %v52 = vsub.f32 %v31, %v50
  %v53 = vsub.f32 %v32, %v49
  %v54 = vsub.f32 %v33, %v50
  %v55 = vmul.f32 %v51, %v51
  %v56 = vmul.f32 %v52, %v52
  %v57 = vsel %vm34, %v55, 0.0
  %58 = vadd.xlane.f32.xlu0 %v57
  %v59 = vpop.xlane.xlu0 %58
  %v60 = vsel %vm34, %v56, 0.0
  %61 = vadd.xlane.f32.xlu0 %v60
  %v62 = vpop.xlane.xlu0 %61
  %v63 = vmul.f32 %v53, %v53
  %v64 = vmul.f32 %v54, %v54
  %v65 = vsel %vm34, %v63, 0.0
  %66 = vadd.xlane.f32.xlu0 %v65
  %v67 = vpop.xlane.xlu0 %66
  %v68 = vsel %vm34, %v64, 0.0
  %69 = vadd.xlane.f32.xlu0 %v68
  %v70 = vpop.xlane.xlu0 %69
  %v71 = vadd.f32 %v59, %v67
  %v72 = vadd.f32 %v62, %v70
  %v73 = vmul.f32 %v71, 0.015625
  %v74 = vmul.f32 %v72, 0.015625
  %v75 = vadd.f32 %v73, 1e-05
  %v76 = vadd.f32 %v74, 1e-05
  %v77 = vrsqrt.pop %v75
  %v78 = vrsqrt.pop %v76
  %v79 = vmul.f32 %v51, %v77
  %v80 = vmul.f32 %v52, %v78
  %v81 = vld [vmem:[%s2] sm:$0x1]
  %v82 = vlaneseq
  %v83 = vshrl.u32 %v82, 7
  %v84 = vsub.s32 0, %v83
  %v85 = vrot.slane %v81, %v84
  %v86 = vmul.f32 %v79, %v85
  %v87 = vmul.f32 %v80, %v85
  %v88 = vld [vmem:[%s2 + $0x1] sm:$0x1]
  %v89 = vlaneseq
  %v90 = vshrl.u32 %v89, 7
  %v91 = vsub.s32 0, %v90
  %v92 = vrot.slane %v88, %v91
  %v93 = vadd.f32 %v86, %v92
  %v94 = vadd.f32 %v87, %v92
  %v95 = vmul.f32 %v53, %v77
  %v96 = vmul.f32 %v54, %v78
  %v97 = vld [vmem:[%s2 + $0x2] sm:$0x1]
  %v98 = vlaneseq
  %v99 = vshrl.u32 %v98, 7
  %v100 = vsub.s32 0, %v99
  %v101 = vrot.slane %v97, %v100
  %v102 = vmul.f32 %v95, %v101
  %v103 = vmul.f32 %v96, %v101
  %v104 = vld [vmem:[%s2 + $0x3] sm:$0x1]
  %v105 = vlaneseq
  %v106 = vshrl.u32 %v105, 7
  %v107 = vsub.s32 0, %v106
  %v108 = vrot.slane %v104, %v107
  %v109 = vadd.f32 %v102, %v108
  %v110 = vadd.f32 %v103, %v108
  %v111 = vpack.c.bf16 %v94, %v93
  %v112 = vld [vmem:[%s3] sm:$0xf]
  %v113 = vld [vmem:[%s3 + $0x4] sm:$0xf]
  %v114 = vld [vmem:[%s3 + $0x8] sm:$0xf]
  %v115 = vld [vmem:[%s3 + $0xc] sm:$0xf]
  %v116 = vpack.c.bf16 %v110, %v109
  %v117 = vld [vmem:[%s4] sm:$0xf]
  %v118 = vld [vmem:[%s4 + $0x4] sm:$0xf]
  %v119 = vld [vmem:[%s4 + $0x8] sm:$0xf]
  %v120 = vld [vmem:[%s4 + $0xc] sm:$0xf]
  %v125 = vunpack.c.l.b16 %v117
  %v126 = vunpack.c.l.b16 %v118
  %v127 = vunpack.c.l.b16 %v119
  %v128 = vunpack.c.l.b16 %v120
  %v129 = vpack.c.b16 %v126, %v125
  %v130 = vpack.c.b16 %v128, %v127
  %v134 = vsel %vm34, %v116, 0
  %136 = vmatprep.subr.bf16.mxu0 0
  %137 = vmatpush1.bf16.msra.mxu0 %v129
  %138 = vmatprep.subr.bf16.mxu0 0
  %139 = vmatpush1.bf16.msra.mxu0 %v130
  %140 = vmatprep.subr.bf16.mxu0 0
  %141 = vmatpush1.bf16.msra.mxu0 0
  %142 = vmatprep.subr.bf16.mxu0 0
  %143 = vmatpush1.bf16.msra.mxu0 0
  %144 = vmatprep.subr.bf16.mxu0 0
  %145 = vmatpush1.bf16.msra.mxu0 0
  %146 = vmatprep.subr.bf16.mxu0 0
  %147 = vmatpush1.bf16.msra.mxu0 0
  %148 = vmatprep.subr.bf16.mxu0 0
  %149 = vmatpush1.bf16.msra.mxu0 0
  %150 = vmatprep.subr.bf16.mxu0 0
  %151 = vmatpush1.bf16.msra.mxu0 0
  %152 = vmatprep.subr.bf16.mxu0 0
  %153 = vmatpush1.bf16.msra.mxu0 0
  %154 = vmatprep.subr.bf16.mxu0 0
  %155 = vmatpush1.bf16.msra.mxu0 0
  %156 = vmatprep.subr.bf16.mxu0 0
  %157 = vmatpush1.bf16.msra.mxu0 0
  %158 = vmatprep.subr.bf16.mxu0 0
  %159 = vmatpush1.bf16.msra.mxu0 0
  %160 = vmatprep.subr.bf16.mxu0 0
  %161 = vmatpush1.bf16.msra.mxu0 0
  %162 = vmatprep.subr.bf16.mxu0 0
  %163 = vmatpush1.bf16.msra.mxu0 0
  %164 = vmatprep.subr.bf16.mxu0 0
  %165 = vmatpush1.bf16.msra.mxu0 0
  %166 = vmatprep.subr.bf16.mxu0 0
  %167 = vmatpush1.bf16.msra.mxu0 0
  %168 = vmatprep.mubr.bf16.mxu0 0
  %169 = vmatmul.mubr.bf16.gmra.mrb[0].mxu0 %v134
  %v170 = vpop.f32.mrb[0].mxu0
  %v171 = vadd.f32 0.0, %v170
  %v172 = vpop.f32.mrb[0].mxu0
  %v173 = vpop.f32.mrb[0].mxu0
  %v174 = vadd.f32 0.0, %v173
  %v175 = vpop.f32.mrb[0].mxu0
  %176 = vdwg.mxu0
  %v181 = vunpack.c.l.b16 %v112
  %v182 = vunpack.c.l.b16 %v113
  %v183 = vunpack.c.l.b16 %v114
  %v184 = vunpack.c.l.b16 %v115
  %v185 = vpack.c.b16 %v182, %v181
  %v186 = vpack.c.b16 %v184, %v183
  %v190 = vsel %vm34, %v111, 0
  %192 = vmatprep.subr.bf16.mxu0 0
  %193 = vmatpush1.bf16.msra.mxu0 %v185
  %194 = vmatprep.subr.bf16.mxu0 0
  %195 = vmatpush1.bf16.msra.mxu0 %v186
  %196 = vmatprep.subr.bf16.mxu0 0
  %197 = vmatpush1.bf16.msra.mxu0 0
  %198 = vmatprep.subr.bf16.mxu0 0
  %199 = vmatpush1.bf16.msra.mxu0 0
  %200 = vmatprep.subr.bf16.mxu0 0
  %201 = vmatpush1.bf16.msra.mxu0 0
  %202 = vmatprep.subr.bf16.mxu0 0
  %203 = vmatpush1.bf16.msra.mxu0 0
  %204 = vmatprep.subr.bf16.mxu0 0
  %205 = vmatpush1.bf16.msra.mxu0 0
  %206 = vmatprep.subr.bf16.mxu0 0
  %207 = vmatpush1.bf16.msra.mxu0 0
  %208 = vmatprep.subr.bf16.mxu0 0
  %209 = vmatpush1.bf16.msra.mxu0 0
  %210 = vmatprep.subr.bf16.mxu0 0
  %211 = vmatpush1.bf16.msra.mxu0 0
  %212 = vmatprep.subr.bf16.mxu0 0
  %213 = vmatpush1.bf16.msra.mxu0 0
  %214 = vmatprep.subr.bf16.mxu0 0
  %215 = vmatpush1.bf16.msra.mxu0 0
  %216 = vmatprep.subr.bf16.mxu0 0
  %217 = vmatpush1.bf16.msra.mxu0 0
  %218 = vmatprep.subr.bf16.mxu0 0
  %219 = vmatpush1.bf16.msra.mxu0 0
  %220 = vmatprep.subr.bf16.mxu0 0
  %221 = vmatpush1.bf16.msra.mxu0 0
  %222 = vmatprep.subr.bf16.mxu0 0
  %223 = vmatpush1.bf16.msra.mxu0 0
  %224 = vmatprep.mubr.bf16.mxu0 0
  %225 = vmatmul.mubr.bf16.gmra.mrb[0].mxu0 %v190
  %v226 = vpop.f32.mrb[0].mxu0
  %v227 = vadd.f32 %v171, %v226
  %v228 = vpop.f32.mrb[0].mxu0
  %v229 = vpop.f32.mrb[0].mxu0
  %v230 = vadd.f32 %v174, %v229
  %v231 = vpop.f32.mrb[0].mxu0
  %232 = vdwg.mxu0
  %v233 = vld [vmem:[%s2 + $0x4] sm:$0x1]
  %v234 = vlaneseq
  %v235 = vshrl.u32 %v234, 7
  %v236 = vsub.s32 0, %v235
  %v237 = vrot.slane %v233, %v236
  %v238 = vadd.f32 %v227, %v237
  %v239 = vadd.f32 %v230, %v237
  %v240 = vmul.f32 %v238, 0.5
  %v241 = vmul.f32 %v239, 0.5
  %v242 = vmul.f32 %v238, 0.70710677
  %v243 = vmul.f32 %v239, 0.70710677
  %v244 = verf.f32.pop %v242
  %v245 = verf.f32.pop %v243
  %v246 = vadd.f32 %v244, 1.0
  %v247 = vadd.f32 %v245, 1.0
  %v248 = vmul.f32 %v240, %v246
  %v249 = vmul.f32 %v241, %v247
  %v250 = vpack.c.bf16 %v249, %v248
  %v251 = vld [vmem:[%s5] sm:$0xf]
  %v252 = vld [vmem:[%s5 + $0x4] sm:$0xf]
  %v253 = vld [vmem:[%s5 + $0x8] sm:$0xf]
  %v254 = vld [vmem:[%s5 + $0xc] sm:$0xf]
  %v255 = vld [vmem:[%s2 + $0x5] sm:$0x1]
  %v256 = vlaneseq
  %v257 = vshrl.u32 %v256, 7
  %v258 = vsub.s32 0, %v257
  %v259 = vrot.slane %v255, %v258
  %v264 = vunpack.c.l.b16 %v251
  %v265 = vunpack.c.l.b16 %v252
  %v266 = vunpack.c.l.b16 %v253
  %v267 = vunpack.c.l.b16 %v254
  %v268 = vpack.c.b16 %v265, %v264
  %v269 = vpack.c.b16 %v267, %v266
  %v273 = vsel %vm34, %v250, 0
  %275 = vmatprep.subr.bf16.mxu0 0
  %276 = vmatpush1.bf16.msra.mxu0 %v268
  %277 = vmatprep.subr.bf16.mxu0 0
  %278 = vmatpush1.bf16.msra.mxu0 %v269
  %279 = vmatprep.subr.bf16.mxu0 0
  %280 = vmatpush1.bf16.msra.mxu0 0
  %281 = vmatprep.subr.bf16.mxu0 0
  %282 = vmatpush1.bf16.msra.mxu0 0
  %283 = vmatprep.subr.bf16.mxu0 0
  %284 = vmatpush1.bf16.msra.mxu0 0
  %285 = vmatprep.subr.bf16.mxu0 0
  %286 = vmatpush1.bf16.msra.mxu0 0
  %287 = vmatprep.subr.bf16.mxu0 0
  %288 = vmatpush1.bf16.msra.mxu0 0
  %289 = vmatprep.subr.bf16.mxu0 0
  %290 = vmatpush1.bf16.msra.mxu0 0
  %291 = vmatprep.subr.bf16.mxu0 0
  %292 = vmatpush1.bf16.msra.mxu0 0
  %293 = vmatprep.subr.bf16.mxu0 0
  %294 = vmatpush1.bf16.msra.mxu0 0
  %295 = vmatprep.subr.bf16.mxu0 0
  %296 = vmatpush1.bf16.msra.mxu0 0
  %297 = vmatprep.subr.bf16.mxu0 0
  %298 = vmatpush1.bf16.msra.mxu0 0
  %299 = vmatprep.subr.bf16.mxu0 0
  %300 = vmatpush1.bf16.msra.mxu0 0
  %301 = vmatprep.subr.bf16.mxu0 0
  %302 = vmatpush1.bf16.msra.mxu0 0
  %303 = vmatprep.subr.bf16.mxu0 0
  %304 = vmatpush1.bf16.msra.mxu0 0
  %305 = vmatprep.subr.bf16.mxu0 0
  %306 = vmatpush1.bf16.msra.mxu0 0
  %307 = vmatprep.mubr.bf16.mxu0 0
  %308 = vmatmul.mubr.bf16.gmra.mrb[0].mxu0 %v273
  %v309 = vpop.f32.mrb[0].mxu0
  %v310 = vadd.f32 %v259, %v309
  %v311 = vpop.f32.mrb[0].mxu0
  %v312 = vpop.f32.mrb[0].mxu0
  %v313 = vadd.f32 %v259, %v312
  %v314 = vpop.f32.mrb[0].mxu0
  %315 = vdwg.mxu0
  %v316 = vadd.f32 %v310, %v30
  %v317 = vadd.f32 %v313, %v31
  %v318 = vld [vmem:[%s2 + $0x6] sm:$0x1]
  %v319 = vld [vmem:[%s2 + $0x7] sm:$0x1]
  %v320 = vsel %vm34, %v316, 0.0
  %321 = vadd.xlane.f32.xlu0 %v320
  %v322 = vpop.xlane.xlu0 %321
  %v323 = vsel %vm34, %v317, 0.0
  %324 = vadd.xlane.f32.xlu0 %v323
  %v325 = vpop.xlane.xlu0 %324
  %v326 = vrcp.pop 32.0
  %v327 = vmul.f32 %v322, %v326
  %v328 = vmul.f32 %v325, %v326
  %v329 = vsub.f32 %v316, %v327
  %v330 = vsub.f32 %v317, %v328
  %v331 = vmul.f32 %v329, %v329
  %v332 = vmul.f32 %v330, %v330
  %v333 = vsel %vm34, %v331, 0.0
  %334 = vadd.xlane.f32.xlu0 %v333
  %v335 = vpop.xlane.xlu0 %334
  %v336 = vsel %vm34, %v332, 0.0
  %337 = vadd.xlane.f32.xlu0 %v336
  %v338 = vpop.xlane.xlu0 %337
  %v339 = vmul.f32 %v335, %v326
  %v340 = vmul.f32 %v338, %v326
  %v341 = vadd.f32 %v339, 1e-05
  %v342 = vadd.f32 %v340, 1e-05
  %v343 = vrsqrt.pop %v341
  %v344 = vrsqrt.pop %v342
  %v345 = vmul.f32 %v329, %v343
  %v346 = vmul.f32 %v330, %v344
  %v347 = vlaneseq
  %v348 = vshrl.u32 %v347, 7
  %v349 = vsub.s32 0, %v348
  %v350 = vrot.slane %v318, %v349
  %v351 = vmul.f32 %v345, %v350
  %v352 = vmul.f32 %v346, %v350
  %v353 = vlaneseq
  %v354 = vshrl.u32 %v353, 7
  %v355 = vsub.s32 0, %v354
  %v356 = vrot.slane %v319, %v355
  %v357 = vadd.f32 %v351, %v356
  %v358 = vadd.f32 %v352, %v356
  %v359 = vpack.c.bf16 %v358, %v357
  %v360 = vld [vmem:[%s6] sm:$0xf]
  %v361 = vld [vmem:[%s6 + $0x4] sm:$0xf]
  %v362 = vld [vmem:[%s6 + $0x8] sm:$0xf]
  %v363 = vld [vmem:[%s6 + $0xc] sm:$0xf]
  %v364 = vld [vmem:[%s2 + $0x8] sm:$0x1]
  %v365 = vlaneseq
  %v366 = vshrl.u32 %v365, 7
  %v367 = vsub.s32 0, %v366
  %v368 = vrot.slane %v364, %v367
  %v373 = vunpack.c.l.b16 %v360
  %v374 = vunpack.c.l.b16 %v361
  %v375 = vunpack.c.l.b16 %v362
  %v376 = vunpack.c.l.b16 %v363
  %v377 = vpack.c.b16 %v374, %v373
  %v378 = vpack.c.b16 %v376, %v375
  %v382 = vsel %vm34, %v359, 0
  %384 = vmatprep.subr.bf16.mxu0 0
  %385 = vmatpush1.bf16.msra.mxu0 %v377
  %386 = vmatprep.subr.bf16.mxu0 0
  %387 = vmatpush1.bf16.msra.mxu0 %v378
  %388 = vmatprep.subr.bf16.mxu0 0
  %389 = vmatpush1.bf16.msra.mxu0 0
  %390 = vmatprep.subr.bf16.mxu0 0
  %391 = vmatpush1.bf16.msra.mxu0 0
  %392 = vmatprep.subr.bf16.mxu0 0
  %393 = vmatpush1.bf16.msra.mxu0 0
  %394 = vmatprep.subr.bf16.mxu0 0
  %395 = vmatpush1.bf16.msra.mxu0 0
  %396 = vmatprep.subr.bf16.mxu0 0
  %397 = vmatpush1.bf16.msra.mxu0 0
  %398 = vmatprep.subr.bf16.mxu0 0
  %399 = vmatpush1.bf16.msra.mxu0 0
  %400 = vmatprep.subr.bf16.mxu0 0
  %401 = vmatpush1.bf16.msra.mxu0 0
  %402 = vmatprep.subr.bf16.mxu0 0
  %403 = vmatpush1.bf16.msra.mxu0 0
  %404 = vmatprep.subr.bf16.mxu0 0
  %405 = vmatpush1.bf16.msra.mxu0 0
  %406 = vmatprep.subr.bf16.mxu0 0
  %407 = vmatpush1.bf16.msra.mxu0 0
  %408 = vmatprep.subr.bf16.mxu0 0
  %409 = vmatpush1.bf16.msra.mxu0 0
  %410 = vmatprep.subr.bf16.mxu0 0
  %411 = vmatpush1.bf16.msra.mxu0 0
  %412 = vmatprep.subr.bf16.mxu0 0
  %413 = vmatpush1.bf16.msra.mxu0 0
  %414 = vmatprep.subr.bf16.mxu0 0
  %415 = vmatpush1.bf16.msra.mxu0 0
  %416 = vmatprep.mubr.bf16.mxu0 0
  %417 = vmatmul.mubr.bf16.gmra.mrb[0].mxu0 %v382
  %v418 = vpop.f32.mrb[0].mxu0
  %v419 = vadd.f32 %v368, %v418
  %v420 = vpop.f32.mrb[0].mxu0
  %v421 = vpop.f32.mrb[0].mxu0
  %v422 = vadd.f32 %v368, %v421
  %v423 = vpop.f32.mrb[0].mxu0
  %424 = vdwg.mxu0
  %v425 = vmul.f32 %v419, 0.5
  %v426 = vmul.f32 %v422, 0.5
  %v427 = vmul.f32 %v419, 0.70710677
  %v428 = vmul.f32 %v422, 0.70710677
  %v429 = verf.f32.pop %v427
  %v430 = verf.f32.pop %v428
  %v431 = vadd.f32 %v429, 1.0
  %v432 = vadd.f32 %v430, 1.0
  %v433 = vmul.f32 %v425, %v431
  %v434 = vmul.f32 %v426, %v432
  %v435 = vpack.c.bf16 %v434, %v433
  %v436 = vld [vmem:[%s7] sm:$0xf]
  %v437 = vld [vmem:[%s7 + $0x4] sm:$0xf]
  %v438 = vld [vmem:[%s7 + $0x8] sm:$0xf]
  %v439 = vld [vmem:[%s7 + $0xc] sm:$0xf]
  %v440 = vld [vmem:[%s2 + $0x9] sm:$0x1]
  %v441 = vlaneseq
  %v442 = vshrl.u32 %v441, 7
  %v443 = vsub.s32 0, %v442
  %v444 = vrot.slane %v440, %v443
  %v449 = vunpack.c.l.b16 %v436
  %v450 = vunpack.c.l.b16 %v437
  %v451 = vunpack.c.l.b16 %v438
  %v452 = vunpack.c.l.b16 %v439
  %v453 = vpack.c.b16 %v450, %v449
  %v454 = vpack.c.b16 %v452, %v451
  %v458 = vsel %vm34, %v435, 0
  %460 = vmatprep.subr.bf16.mxu0 0
  %461 = vmatpush1.bf16.msra.mxu0 %v453
  %462 = vmatprep.subr.bf16.mxu0 0
  %463 = vmatpush1.bf16.msra.mxu0 %v454
  %464 = vmatprep.subr.bf16.mxu0 0
  %465 = vmatpush1.bf16.msra.mxu0 0
  %466 = vmatprep.subr.bf16.mxu0 0
  %467 = vmatpush1.bf16.msra.mxu0 0
  %468 = vmatprep.subr.bf16.mxu0 0
  %469 = vmatpush1.bf16.msra.mxu0 0
  %470 = vmatprep.subr.bf16.mxu0 0
  %471 = vmatpush1.bf16.msra.mxu0 0
  %472 = vmatprep.subr.bf16.mxu0 0
  %473 = vmatpush1.bf16.msra.mxu0 0
  %474 = vmatprep.subr.bf16.mxu0 0
  %475 = vmatpush1.bf16.msra.mxu0 0
  %476 = vmatprep.subr.bf16.mxu0 0
  %477 = vmatpush1.bf16.msra.mxu0 0
  %478 = vmatprep.subr.bf16.mxu0 0
  %479 = vmatpush1.bf16.msra.mxu0 0
  %480 = vmatprep.subr.bf16.mxu0 0
  %481 = vmatpush1.bf16.msra.mxu0 0
  %482 = vmatprep.subr.bf16.mxu0 0
  %483 = vmatpush1.bf16.msra.mxu0 0
  %484 = vmatprep.subr.bf16.mxu0 0
  %485 = vmatpush1.bf16.msra.mxu0 0
  %486 = vmatprep.subr.bf16.mxu0 0
  %487 = vmatpush1.bf16.msra.mxu0 0
  %488 = vmatprep.subr.bf16.mxu0 0
  %489 = vmatpush1.bf16.msra.mxu0 0
  %490 = vmatprep.subr.bf16.mxu0 0
  %491 = vmatpush1.bf16.msra.mxu0 0
  %492 = vmatprep.mubr.bf16.mxu0 0
  %493 = vmatmul.mubr.bf16.gmra.mrb[0].mxu0 %v458
  %v494 = vpop.f32.mrb[0].mxu0
  %v495 = vadd.f32 %v444, %v494
  %v496 = vpop.f32.mrb[0].mxu0
  %v497 = vpop.f32.mrb[0].mxu0
  %v498 = vadd.f32 %v444, %v497
  %v499 = vpop.f32.mrb[0].mxu0
  %500 = vdwg.mxu0
  %v501 = vadd.f32 %v495, %v316
  %v502 = vadd.f32 %v498, %v317
  %v503 = vld [vmem:[%s2 + $0xa] sm:$0x1]
  %v504 = vld [vmem:[%s2 + $0xb] sm:$0x1]
  %v505 = vsel %vm34, %v501, 0.0
  %506 = vadd.xlane.f32.xlu0 %v505
  %v507 = vpop.xlane.xlu0 %506
  %v508 = vsel %vm34, %v502, 0.0
  %509 = vadd.xlane.f32.xlu0 %v508
  %v510 = vpop.xlane.xlu0 %509
  %v511 = vmul.f32 %v507, %v326
  %v512 = vmul.f32 %v510, %v326
  %v513 = vsub.f32 %v501, %v511
  %v514 = vsub.f32 %v502, %v512
  %v515 = vmul.f32 %v513, %v513
  %v516 = vmul.f32 %v514, %v514
  %v517 = vsel %vm34, %v515, 0.0
  %518 = vadd.xlane.f32.xlu0 %v517
  %v519 = vpop.xlane.xlu0 %518
  %v520 = vsel %vm34, %v516, 0.0
  %521 = vadd.xlane.f32.xlu0 %v520
  %v522 = vpop.xlane.xlu0 %521
  %v523 = vmul.f32 %v519, %v326
  %v524 = vmul.f32 %v522, %v326
  %v525 = vadd.f32 %v523, 1e-05
  %v526 = vadd.f32 %v524, 1e-05
  %v527 = vrsqrt.pop %v525
  %v528 = vrsqrt.pop %v526
  %v529 = vmul.f32 %v513, %v527
  %v530 = vmul.f32 %v514, %v528
  %v531 = vlaneseq
  %v532 = vshrl.u32 %v531, 7
  %v533 = vsub.s32 0, %v532
  %v534 = vrot.slane %v503, %v533
  %v535 = vmul.f32 %v529, %v534
  %v536 = vmul.f32 %v530, %v534
  %v537 = vlaneseq
  %v538 = vshrl.u32 %v537, 7
  %v539 = vsub.s32 0, %v538
  %v540 = vrot.slane %v504, %v539
  %v541 = vadd.f32 %v535, %v540
  %v542 = vadd.f32 %v536, %v540
  %543 = vst.msk [vmem:[%s8] sm:$0xff] %vm34, %v541
  %544 = vst.msk [vmem:[%s8 + $0x8] sm:$0xff] %vm34, %v542
  // Predicated region
  $region34: #{_postfuse_forward.1} parent=0 // pred_check
    _
  $region35: #{_postfuse_forward.1} parent=0 // pred_check_branch
    %546 = sbr.rel (0) target = $region37
  $region36: #{_postfuse_forward.1} parent=0 // pred_region
    _
  $region37: #{_postfuse_forward.1} parent=0 // pred_fallthru
    _
  // Predicated region
  $region38: #{_postfuse_forward.1} parent=0 // pred_check
    _
  $region39: #{_postfuse_forward.1} parent=0 // pred_check_branch
    %548 = sbr.rel (0) target = $region41
  $region40: #{_postfuse_forward.1} parent=0 // pred_region
    _
  $region41: #{_postfuse_forward.1} parent=0 // pred_fallthru
    _

</llo_original>
